<compile_context>
chip_gen: v5e
topology: v5e:2x2
jax: 0.10.0
libtpu: 0.0.40
codegen_flags: <defaults>
</compile_context>

<pallas_src>
import jax
import jax.numpy as jnp
from jax import lax
from jax.experimental import pallas as pl
from jax.experimental.pallas import tpu as pltpu


# ---------------- configuration (small, consistent with the module) ---------
CHANNELS = 1
IMG_SIZE = 16
IN_DIM = CHANNELS * IMG_SIZE * IMG_SIZE   # prod(img_shape) = 256 (lane-dense)
HIDDEN = 512
LATENT_DIM = 32
BATCH = 8                                  # BatchNorm1d needs batch > 1
BN_EPS = 1e-5
LEAKY_SLOPE = 0.2


def _leaky_relu(x):
    return jnp.where(x > 0, x, LEAKY_SLOPE * x)


def encoder_kernel(img_ref, eps_ref, w1_ref, w2_ref, wh_ref,
                   pvec_ref, bh_ref, z_ref, mu_ref, logvar_ref):
    # Whole MLP (3 MXU matmuls + VPU elementwise + batch-dim reduction for BN
    # + EUP exp) in one grid-less invocation; everything fits in VMEM.
    x = img_ref[...]                         # (B, IN_DIM) float32
    inv_b = 1.0 / x.shape[0]                 # static Python float

    b1 = pvec_ref[0:1, :]                    # (1, HIDDEN)
    gamma = pvec_ref[1:2, :]
    beta = pvec_ref[2:3, :]

    # ---- Linear(IN_DIM, 512) + LeakyReLU(0.2) ----
    # bf16 operands on the MXU, f32 accumulation; activations stay f32.
    h1 = jnp.dot(x.astype(jnp.bfloat16), w1_ref[...],
                 preferred_element_type=jnp.float32) + b1
    h1 = _leaky_relu(h1)

    # ---- Linear(512, 512) -- bias omitted: it cancels exactly under the
    #      batch-mean subtraction of the following BatchNorm1d ----
    h2 = jnp.dot(h1.astype(jnp.bfloat16), w2_ref[...],
                 preferred_element_type=jnp.float32)

    # ---- BatchNorm1d(512): training-mode batch stats, single pass ----
    s1 = jnp.sum(h2, axis=0, keepdims=True)
    s2 = jnp.sum(h2 * h2, axis=0, keepdims=True)
    mean = s1 * inv_b
    var = s2 * inv_b - mean * mean                       # biased variance
    scale = gamma * lax.rsqrt(var + BN_EPS)              # gamma / sqrt(var+eps)
    shift = beta - mean * scale
    h = _leaky_relu(h2 * scale + shift)

    # ---- fused mu/logvar heads: one Linear(512, 2*latent) matmul ----
    head = jnp.dot(h.astype(jnp.bfloat16), wh_ref[...],
                   preferred_element_type=jnp.float32) + bh_ref[...]
    mu = head[:, :LATENT_DIM]
    logvar = head[:, LATENT_DIM:]

    # ---- reparameterization: z = mu + eps * exp(0.5 * logvar) ----
    z = mu + eps_ref[...] * jnp.exp(0.5 * logvar)

    z_ref[...] = z
    mu_ref[...] = mu
    logvar_ref[...] = logvar


def encoder_forward(img, eps, params):
    """img: (B, C, H, W) f32, eps: (B, latent) f32 -> (z, mu, logvar)."""
    w1, w2, wh, pvec, bh = params
    B = img.shape[0]
    img_flat = img.reshape(B, -1)            # img.view(B, -1): pure JAX glue

    out_shape = tuple(
        jax.ShapeDtypeStruct((B, LATENT_DIM), jnp.float32) for _ in range(3))

    z, mu, logvar = pl.pallas_call(
        encoder_kernel,
        out_shape=out_shape,
        in_specs=[
            pl.BlockSpec(memory_space=pltpu.VMEM),  # img_flat (B, IN_DIM)   f32
            pl.BlockSpec(memory_space=pltpu.VMEM),  # eps      (B, latent)   f32
            pl.BlockSpec(memory_space=pltpu.VMEM),  # w1       (IN_DIM, 512) bf16
            pl.BlockSpec(memory_space=pltpu.VMEM),  # w2       (512, 512)    bf16
            pl.BlockSpec(memory_space=pltpu.VMEM),  # w_heads  (512, 2*lat)  bf16
            pl.BlockSpec(memory_space=pltpu.VMEM),  # pvec     (3, 512) [b1;gamma;beta]
            pl.BlockSpec(memory_space=pltpu.VMEM),  # bh       (1, 2*lat) [b_mu|b_lv]
        ],
        out_specs=tuple(pl.BlockSpec(memory_space=pltpu.VMEM) for _ in range(3)),
    )(img_flat, eps, w1, w2, wh, pvec, bh)

    return z, mu, logvar


def init_params(key):
    """Deterministic synthetic parameters (shapes match the nn.Module)."""
    k1, k2, k3, k4, k5, k6, k7, k8 = jax.random.split(key, 8)
    # Weights stored as (in, out) so the kernel does x @ W; cast to bf16 for
    # half the HBM->VMEM traffic (f32 accumulation preserved in the matmuls).
    w1 = (jax.random.normal(k1, (IN_DIM, HIDDEN), jnp.float32) * 0.05
          ).astype(jnp.bfloat16)
    w2 = (jax.random.normal(k2, (HIDDEN, HIDDEN), jnp.float32) * 0.05
          ).astype(jnp.bfloat16)
    wmu = jax.random.normal(k3, (HIDDEN, LATENT_DIM), jnp.float32) * 0.05
    wlv = jax.random.normal(k4, (HIDDEN, LATENT_DIM), jnp.float32) * 0.05
    wh = jnp.concatenate([wmu, wlv], axis=1).astype(jnp.bfloat16)  # (512, 2L)

    b1 = jax.random.normal(k5, (HIDDEN,), jnp.float32) * 0.02
    gamma = 1.0 + jax.random.normal(k6, (HIDDEN,), jnp.float32) * 0.02
    beta = jax.random.normal(k7, (HIDDEN,), jnp.float32) * 0.02
    pvec = jnp.stack([b1, gamma, beta], axis=0)          # (3, HIDDEN) f32

    bh = jax.random.normal(k8, (1, 2 * LATENT_DIM), jnp.float32) * 0.02
    # NOTE: the bias of the second Linear(512,512) is intentionally absent:
    # it is a mathematical no-op under the following training-mode BatchNorm.
    return (w1, w2, wh, pvec, bh)


def encoder_reference(img, eps, params):
    """Pure-JAX reference with the same mixed-precision recipe."""
    w1, w2, wh, pvec, bh = params
    B = img.shape[0]
    x = img.reshape(B, -1)
    b1, gamma, beta = pvec[0:1, :], pvec[1:2, :], pvec[2:3, :]

    h1 = _leaky_relu(jnp.dot(x.astype(jnp.bfloat16), w1,
                             preferred_element_type=jnp.float32) + b1)
    h2 = jnp.dot(h1.astype(jnp.bfloat16), w2,
                 preferred_element_type=jnp.float32)

    mean = jnp.mean(h2, axis=0, keepdims=True)
    var = jnp.mean((h2 - mean) ** 2, axis=0, keepdims=True)   # biased variance
    hn = _leaky_relu((h2 - mean) * lax.rsqrt(var + BN_EPS) * gamma + beta)

    head = jnp.dot(hn.astype(jnp.bfloat16), wh,
                   preferred_element_type=jnp.float32) + bh
    mu = head[:, :LATENT_DIM]
    logvar = head[:, LATENT_DIM:]
    z = mu + eps * jnp.exp(0.5 * logvar)
    return z, mu, logvar


if __name__ == "__main__":
    key = jax.random.PRNGKey(0)
    k_img, k_eps, k_par = jax.random.split(key, 3)
    img = jax.random.normal(k_img, (BATCH, CHANNELS, IMG_SIZE, IMG_SIZE),
                            jnp.float32)
    eps = jax.random.normal(k_eps, (BATCH, LATENT_DIM), jnp.float32)
    params = init_params(k_par)

    z, mu, logvar = encoder_forward(img, eps, params)
    (z, mu, logvar) = jax.block_until_ready((z, mu, logvar))

    z_ref, mu_ref, lv_ref = encoder_reference(img, eps, params)
    assert z.shape == (BATCH, LATENT_DIM), z.shape
    assert mu.shape == (BATCH, LATENT_DIM), mu.shape
    assert logvar.shape == (BATCH, LATENT_DIM), logvar.shape
    for got, ref in ((z, z_ref), (mu, mu_ref), (logvar, lv_ref)):
        assert jnp.allclose(got, ref, atol=1e-3, rtol=1e-3), \
            float(jnp.max(jnp.abs(got - ref)))

    print("KERNEL_OK")
</pallas_src>

<mosaic_0001>
module attributes {stable_mosaic.version = 11 : i64} {
  func.func @encoder_kernel(%arg0: memref<8x256xf32, #tpu.memory_space<vmem>>, %arg1: memref<8x32xf32, #tpu.memory_space<vmem>>, %arg2: memref<256x512xbf16, #tpu.memory_space<vmem>>, %arg3: memref<512x512xbf16, #tpu.memory_space<vmem>>, %arg4: memref<512x64xbf16, #tpu.memory_space<vmem>>, %arg5: memref<3x512xf32, #tpu.memory_space<vmem>>, %arg6: memref<1x64xf32, #tpu.memory_space<vmem>>, %arg7: memref<8x32xf32, #tpu.memory_space<vmem>>, %arg8: memref<8x32xf32, #tpu.memory_space<vmem>>, %arg9: memref<8x32xf32, #tpu.memory_space<vmem>>) attributes {dimension_semantics = [], scalar_prefetch = 0 : i64, scratch_operands = 0 : i64, tpu.core_type = #tpu.core_type<tc>} {
    %c0 = arith.constant 0 : index
    %c0_0 = arith.constant 0 : index
    %0 = vector.load %arg0[%c0, %c0_0] : memref<8x256xf32, #tpu.memory_space<vmem>>, vector<8x256xf32>
    %c0_1 = arith.constant 0 : index
    %c0_2 = arith.constant 0 : index
    %1 = vector.load %arg5[%c0_1, %c0_2] : memref<3x512xf32, #tpu.memory_space<vmem>>, vector<1x512xf32>
    %c1 = arith.constant 1 : index
    %c0_3 = arith.constant 0 : index
    %2 = vector.load %arg5[%c1, %c0_3] : memref<3x512xf32, #tpu.memory_space<vmem>>, vector<1x512xf32>
    %c2 = arith.constant 2 : index
    %c0_4 = arith.constant 0 : index
    %3 = vector.load %arg5[%c2, %c0_4] : memref<3x512xf32, #tpu.memory_space<vmem>>, vector<1x512xf32>
    %4 = arith.truncf %0 : vector<8x256xf32> to vector<8x256xbf16>
    %c0_5 = arith.constant 0 : index
    %c0_6 = arith.constant 0 : index
    %5 = vector.load %arg2[%c0_5, %c0_6] : memref<256x512xbf16, #tpu.memory_space<vmem>>, vector<256x512xbf16>
    %cst = arith.constant dense<0.000000e+00> : vector<8x512xf32>
    %6 = tpu.matmul %4, %5, %cst {dimension_numbers = #tpu.dot_dimension_numbers<[1], [0], [0], [1], [0, 0, 1, 1], [], []>} : vector<8x256xbf16>, vector<256x512xbf16>, vector<8x512xf32> -> vector<8x512xf32>
    %7 = vector.broadcast %1 : vector<1x512xf32> to vector<8x512xf32>
    %8 = arith.addf %6, %7 : vector<8x512xf32>
    %cst_7 = arith.constant 0.000000e+00 : f32
    %9 = vector.broadcast %cst_7 : f32 to vector<8x512xf32>
    %10 = arith.cmpf ogt, %8, %9 : vector<8x512xf32>
    %cst_8 = arith.constant 2.000000e-01 : f32
    %11 = vector.broadcast %cst_8 : f32 to vector<8x512xf32>
    %12 = arith.mulf %11, %8 : vector<8x512xf32>
    %13 = arith.select %10, %8, %12 : vector<8x512xi1>, vector<8x512xf32>
    %14 = arith.truncf %13 : vector<8x512xf32> to vector<8x512xbf16>
    %c0_9 = arith.constant 0 : index
    %c0_10 = arith.constant 0 : index
    %15 = vector.load %arg3[%c0_9, %c0_10] : memref<512x512xbf16, #tpu.memory_space<vmem>>, vector<512x512xbf16>
    %cst_11 = arith.constant dense<0.000000e+00> : vector<8x512xf32>
    %16 = tpu.matmul %14, %15, %cst_11 {dimension_numbers = #tpu.dot_dimension_numbers<[1], [0], [0], [1], [0, 0, 1, 1], [], []>} : vector<8x512xbf16>, vector<512x512xbf16>, vector<8x512xf32> -> vector<8x512xf32>
    %cst_12 = arith.constant dense<0.000000e+00> : vector<512xf32>
    %17 = vector.multi_reduction <add>, %16, %cst_12 [0] : vector<8x512xf32> to vector<512xf32>
    %18 = vector.shape_cast %17 : vector<512xf32> to vector<1x512xf32>
    %19 = arith.mulf %16, %16 : vector<8x512xf32>
    %cst_13 = arith.constant dense<0.000000e+00> : vector<512xf32>
    %20 = vector.multi_reduction <add>, %19, %cst_13 [0] : vector<8x512xf32> to vector<512xf32>
    %21 = vector.shape_cast %20 : vector<512xf32> to vector<1x512xf32>
    %cst_14 = arith.constant 1.250000e-01 : f32
    %22 = vector.broadcast %cst_14 : f32 to vector<1x512xf32>
    %23 = arith.mulf %18, %22 : vector<1x512xf32>
    %cst_15 = arith.constant 1.250000e-01 : f32
    %24 = vector.broadcast %cst_15 : f32 to vector<1x512xf32>
    %25 = arith.mulf %21, %24 : vector<1x512xf32>
    %26 = arith.mulf %23, %23 : vector<1x512xf32>
    %27 = arith.subf %25, %26 : vector<1x512xf32>
    %cst_16 = arith.constant 9.99999974E-6 : f32
    %28 = vector.broadcast %cst_16 : f32 to vector<1x512xf32>
    %29 = arith.addf %27, %28 : vector<1x512xf32>
    %30 = math.rsqrt %29 : vector<1x512xf32>
    %31 = arith.mulf %2, %30 : vector<1x512xf32>
    %32 = arith.mulf %23, %31 : vector<1x512xf32>
    %33 = arith.subf %3, %32 : vector<1x512xf32>
    %34 = vector.broadcast %31 : vector<1x512xf32> to vector<8x512xf32>
    %35 = arith.mulf %16, %34 : vector<8x512xf32>
    %36 = vector.broadcast %33 : vector<1x512xf32> to vector<8x512xf32>
    %37 = arith.addf %35, %36 : vector<8x512xf32>
    %cst_17 = arith.constant 0.000000e+00 : f32
    %38 = vector.broadcast %cst_17 : f32 to vector<8x512xf32>
    %39 = arith.cmpf ogt, %37, %38 : vector<8x512xf32>
    %cst_18 = arith.constant 2.000000e-01 : f32
    %40 = vector.broadcast %cst_18 : f32 to vector<8x512xf32>
    %41 = arith.mulf %40, %37 : vector<8x512xf32>
    %42 = arith.select %39, %37, %41 : vector<8x512xi1>, vector<8x512xf32>
    %43 = arith.truncf %42 : vector<8x512xf32> to vector<8x512xbf16>
    %c0_19 = arith.constant 0 : index
    %c0_20 = arith.constant 0 : index
    %44 = vector.load %arg4[%c0_19, %c0_20] : memref<512x64xbf16, #tpu.memory_space<vmem>>, vector<512x64xbf16>
    %cst_21 = arith.constant dense<0.000000e+00> : vector<8x64xf32>
    %45 = tpu.matmul %43, %44, %cst_21 {dimension_numbers = #tpu.dot_dimension_numbers<[1], [0], [0], [1], [0, 0, 1, 1], [], []>} : vector<8x512xbf16>, vector<512x64xbf16>, vector<8x64xf32> -> vector<8x64xf32>
    %c0_22 = arith.constant 0 : index
    %c0_23 = arith.constant 0 : index
    %46 = vector.load %arg6[%c0_22, %c0_23] : memref<1x64xf32, #tpu.memory_space<vmem>>, vector<1x64xf32>
    %47 = vector.broadcast %46 : vector<1x64xf32> to vector<8x64xf32>
    %48 = arith.addf %45, %47 : vector<8x64xf32>
    %49 = vector.extract_strided_slice %48 {offsets = [0, 0], sizes = [8, 32], strides = [1, 1]} : vector<8x64xf32> to vector<8x32xf32>
    %50 = vector.extract_strided_slice %48 {offsets = [0, 32], sizes = [8, 32], strides = [1, 1]} : vector<8x64xf32> to vector<8x32xf32>
    %c0_24 = arith.constant 0 : index
    %c0_25 = arith.constant 0 : index
    %51 = vector.load %arg1[%c0_24, %c0_25] : memref<8x32xf32, #tpu.memory_space<vmem>>, vector<8x32xf32>
    %cst_26 = arith.constant 5.000000e-01 : f32
    %52 = vector.broadcast %cst_26 : f32 to vector<8x32xf32>
    %53 = arith.mulf %52, %50 : vector<8x32xf32>
    %54 = math.exp %53 : vector<8x32xf32>
    %55 = arith.mulf %51, %54 : vector<8x32xf32>
    %56 = arith.addf %49, %55 : vector<8x32xf32>
    %c0_27 = arith.constant 0 : index
    %c0_28 = arith.constant 0 : index
    %57 = vector.load %arg7[%c0_27, %c0_28] : memref<8x32xf32, #tpu.memory_space<vmem>>, vector<8x32xf32>
    tpu.vector_store %arg7[%c0_27, %c0_28], %56 {strides = array<i32>} : memref<8x32xf32, #tpu.memory_space<vmem>>, vector<8x32xf32>,
    %c0_29 = arith.constant 0 : index
    %c0_30 = arith.constant 0 : index
    %58 = vector.load %arg8[%c0_29, %c0_30] : memref<8x32xf32, #tpu.memory_space<vmem>>, vector<8x32xf32>
    tpu.vector_store %arg8[%c0_29, %c0_30], %49 {strides = array<i32>} : memref<8x32xf32, #tpu.memory_space<vmem>>, vector<8x32xf32>,
    %c0_31 = arith.constant 0 : index
    %c0_32 = arith.constant 0 : index
    %59 = vector.load %arg9[%c0_31, %c0_32] : memref<8x32xf32, #tpu.memory_space<vmem>>, vector<8x32xf32>
    tpu.vector_store %arg9[%c0_31, %c0_32], %50 {strides = array<i32>} : memref<8x32xf32, #tpu.memory_space<vmem>>, vector<8x32xf32>,
    return
  }
}

</mosaic_0001>

<llo_original>
// kernel: tpu_custom_call.1
$region0: #{tpu_custom_call.1}
  #allocation0 [shape = 'u32[]', space=smem, size = 0x4, offset = 0x4, fixed_abs, tag = 'smem constant byte address 0x4 - core index']
  #allocation1 [shape = 'u32[72,128]{1,0:T(1,128)}', space=vmem, size = 0x9000, scoped, tag = 'internal scratch']
  %s0 = inlined_call_operand.vmem [shape: f32[8,256], index: 0, kind: input, shape index: {}]
  %s1 = inlined_call_operand.vmem [shape: f32[8,32], index: 1, kind: input, shape index: {}]
  %s2 = inlined_call_operand.hbm [shape: bf16[256,512], index: 2, kind: input, shape index: {}]
  %s3 = inlined_call_operand.hbm [shape: bf16[512,512], index: 3, kind: input, shape index: {}]
  %s4 = inlined_call_operand.vmem [shape: bf16[512,64], index: 4, kind: input, shape index: {}]
  %s5 = inlined_call_operand.vmem [shape: f32[3,512], index: 5, kind: input, shape index: {}]
  %s6 = inlined_call_operand.vmem [shape: f32[1,64], index: 6, kind: input, shape index: {}]
  %s7 = inlined_call_operand.hbm [shape: f32[8,32], index: 7, kind: output, shape index: {0}]
  %s8 = inlined_call_operand.hbm [shape: f32[8,32], index: 8, kind: output, shape index: {1}]
  %s9 = inlined_call_operand.hbm [shape: f32[8,32], index: 9, kind: output, shape index: {2}]
  %10 = xla_tuple %s7, %s8, %s9
  %s11 = sld [smem:[#allocation0]]
  $region62: #{tpu_custom_call.1} parent=0
    _
  %s13 = ssub.s32 1, %s11
  %s14 = scalar_select 0, %s13, %s11
  $region1: #{tpu_custom_call.1} parent=0
    #allocation2 [shape = 'u8[262144]{0}', space=vmem, size = 0x40000, scoped, tag = 'input window, operand 2, single buffered']
    #allocation3 [shape = 's32[1]{0}', space=sflag, size = 0x4, scoped, tag = 'scoped memory for tpu_custom_call.1']
    #allocation4 [shape = 's32[1]{0}', space=sflag, size = 0x4, scoped, tag = 'scoped memory for tpu_custom_call.1']
    #allocation5 [shape = 'u8[524288]{0}', space=vmem, size = 0x80000, scoped, tag = 'input window, operand 3, single buffered']
    #allocation6 [shape = 's32[1]{0}', space=sflag, size = 0x4, scoped, tag = 'scoped memory for tpu_custom_call.1']
    #allocation7 [shape = 'u8[4096]{0}', space=vmem, size = 0x1000, scoped, tag = 'output window, operand 0, single buffered']
    #allocation8 [shape = 'u8[4096]{0}', space=vmem, size = 0x1000, scoped, tag = 'output window, operand 1, single buffered']
    #allocation9 [shape = 's32[1]{0}', space=sflag, size = 0x4, scoped, tag = 'scoped memory for tpu_custom_call.1']
    #allocation10 [shape = 'u8[4096]{0}', space=vmem, size = 0x1000, scoped, tag = 'output window, operand 2, single buffered']
    %15 = vsyncpa [#allocation3], 0
    %16 = vsyncpa [#allocation6], 0
    %17 = vsyncpa [#allocation4], 0
    %18 = vsyncpa [#allocation9], 0
    // Predicated region
    $region2: #{tpu_custom_call.1} parent=1 // pred_check
      _
    $region3: #{tpu_custom_call.1} parent=1 // pred_check_branch
      %20 = sbr.rel (0) target = $region5
    $region4: #{tpu_custom_call.1} parent=1 // pred_region
      _
    $region5: #{tpu_custom_call.1} parent=1 // pred_fallthru
      _
    // Predicated region
    $region6: #{tpu_custom_call.1} parent=1 // pred_check
      _
    $region7: #{tpu_custom_call.1} parent=1 // pred_check_branch
      %22 = sbr.rel (0) target = $region9
    $region8: #{tpu_custom_call.1} parent=1 // pred_region
      _
    $region9: #{tpu_custom_call.1} parent=1 // pred_fallthru
      _
    // Predicated region
    $region10: #{tpu_custom_call.1} parent=1 // pred_check
      _
    $region11: #{tpu_custom_call.1} parent=1 // pred_check_branch
      %24 = sbr.rel (0) target = $region13
    $region12: #{tpu_custom_call.1} parent=1 // pred_region
      %26 = vsyncadd [#allocation3], 0
      %s27 = sshll.u32 %s2, 4
      %s28 = int_to_ptr.hbm [resolvable:$true] %s27
      %s29 = sshll.u32 [#allocation2], 4
      %s30 = int_to_ptr.vmem [resolvable:$true] %s29
      %35 = dma.hbm_to_vmem [thread:$0]  %s28, 8192, %s30, [#allocation3], 256, 256, 16
    $region13: #{tpu_custom_call.1} parent=1 // pred_fallthru
      _
    // Predicated region
    $region14: #{tpu_custom_call.1} parent=1 // pred_check
      _
    $region15: #{tpu_custom_call.1} parent=1 // pred_check_branch
      %37 = sbr.rel (0) target = $region17
    $region16: #{tpu_custom_call.1} parent=1 // pred_region
      %39 = vsyncadd [#allocation6], 0
      %s40 = sshll.u32 %s3, 4
      %s41 = int_to_ptr.hbm [resolvable:$true] %s40
      %s42 = sshll.u32 [#allocation5], 4
      %s43 = int_to_ptr.vmem [resolvable:$true] %s42
      %48 = dma.hbm_to_vmem [thread:$0]  %s41, 16384, %s43, [#allocation6], 256, 256, 16
    $region17: #{tpu_custom_call.1} parent=1 // pred_fallthru
      _
    // Predicated region
    $region18: #{tpu_custom_call.1} parent=1 // pred_check
      _
    $region19: #{tpu_custom_call.1} parent=1 // pred_check_branch
      %50 = sbr.rel (0) target = $region21
    $region20: #{tpu_custom_call.1} parent=1 // pred_region
      _
    $region21: #{tpu_custom_call.1} parent=1 // pred_fallthru
      _
    // Predicated region
    $region22: #{tpu_custom_call.1} parent=1 // pred_check
      _
    $region23: #{tpu_custom_call.1} parent=1 // pred_check_branch
      %52 = sbr.rel (0) target = $region25
    $region24: #{tpu_custom_call.1} parent=1 // pred_region
      _
    $region25: #{tpu_custom_call.1} parent=1 // pred_fallthru
      _
    // Predicated region
    $region26: #{tpu_custom_call.1} parent=1 // pred_check
      _
    $region27: #{tpu_custom_call.1} parent=1 // pred_check_branch
      %54 = sbr.rel (0) target = $region29
    $region28: #{tpu_custom_call.1} parent=1 // pred_region
      _
    $region29: #{tpu_custom_call.1} parent=1 // pred_fallthru
      _
    // Predicated region
    $region30: #{tpu_custom_call.1} parent=1 // pred_check
      _
    $region31: #{tpu_custom_call.1} parent=1 // pred_check_branch
      %56 = sbr.rel (0) target = $region33
    $region32: #{tpu_custom_call.1} parent=1 // pred_region
      %58 = dma.done [#allocation3], 8192
    $region33: #{tpu_custom_call.1} parent=1 // pred_fallthru
      _
    // Predicated region
    $region34: #{tpu_custom_call.1} parent=1 // pred_check
      _
    $region35: #{tpu_custom_call.1} parent=1 // pred_check_branch
      %60 = sbr.rel (0) target = $region37
    $region36: #{tpu_custom_call.1} parent=1 // pred_region
      %62 = dma.done [#allocation6], 16384
    $region37: #{tpu_custom_call.1} parent=1 // pred_fallthru
      _
    %v63 = vld [vmem:[%s0] sm:$0xff]
    %v64 = vld [vmem:[%s0 + $0x8] sm:$0xff]
    %v65 = vld [vmem:[%s5] ss:$4 sm:$0xf]
    %s66 = scalar_lea.vmem %s5, 1
    %v67 = vld [vmem:[%s66] ss:$4 sm:$0xf]
    %s68 = scalar_lea.vmem %s5, 2
    %v69 = vld [vmem:[%s68] ss:$4 sm:$0xf]
    %v70 = vpack.c.bf16 %v63, %v63
    %v71 = vpack.c.bf16 %v64, %v64
    %v72 = vld [vmem:[#allocation2] sm:$0xff]
    %v73 = vld [vmem:[#allocation2 + $0x8] sm:$0xff]
    %v74 = vld [vmem:[#allocation2 + $0x10] sm:$0xff]
    %v75 = vld [vmem:[#allocation2 + $0x18] sm:$0xff]
    %v76 = vld [vmem:[#allocation2 + $0x20] sm:$0xff]
    %v77 = vld [vmem:[#allocation2 + $0x28] sm:$0xff]
    %v78 = vld [vmem:[#allocation2 + $0x30] sm:$0xff]
    %v79 = vld [vmem:[#allocation2 + $0x38] sm:$0xff]
    %v80 = vld [vmem:[#allocation2 + $0x40] sm:$0xff]
    %v81 = vld [vmem:[#allocation2 + $0x48] sm:$0xff]
    %v82 = vld [vmem:[#allocation2 + $0x50] sm:$0xff]
    %v83 = vld [vmem:[#allocation2 + $0x58] sm:$0xff]
    %v84 = vld [vmem:[#allocation2 + $0x60] sm:$0xff]
    %v85 = vld [vmem:[#allocation2 + $0x68] sm:$0xff]
    %v86 = vld [vmem:[#allocation2 + $0x70] sm:$0xff]
    %v87 = vld [vmem:[#allocation2 + $0x78] sm:$0xff]
    %v88 = vld [vmem:[#allocation2 + $0x80] sm:$0xff]
    %v89 = vld [vmem:[#allocation2 + $0x88] sm:$0xff]
    %v90 = vld [vmem:[#allocation2 + $0x90] sm:$0xff]
    %v91 = vld [vmem:[#allocation2 + $0x98] sm:$0xff]
    %v92 = vld [vmem:[#allocation2 + $0xa0] sm:$0xff]
    %v93 = vld [vmem:[#allocation2 + $0xa8] sm:$0xff]
    %v94 = vld [vmem:[#allocation2 + $0xb0] sm:$0xff]
    %v95 = vld [vmem:[#allocation2 + $0xb8] sm:$0xff]
    %v96 = vld [vmem:[#allocation2 + $0xc0] sm:$0xff]
    %v97 = vld [vmem:[#allocation2 + $0xc8] sm:$0xff]
    %v98 = vld [vmem:[#allocation2 + $0xd0] sm:$0xff]
    %v99 = vld [vmem:[#allocation2 + $0xd8] sm:$0xff]
    %v100 = vld [vmem:[#allocation2 + $0xe0] sm:$0xff]
    %v101 = vld [vmem:[#allocation2 + $0xe8] sm:$0xff]
    %v102 = vld [vmem:[#allocation2 + $0xf0] sm:$0xff]
    %v103 = vld [vmem:[#allocation2 + $0xf8] sm:$0xff]
    %v104 = vld [vmem:[#allocation2 + $0x100] sm:$0xff]
    %v105 = vld [vmem:[#allocation2 + $0x108] sm:$0xff]
    %v106 = vld [vmem:[#allocation2 + $0x110] sm:$0xff]
    %v107 = vld [vmem:[#allocation2 + $0x118] sm:$0xff]
    %v108 = vld [vmem:[#allocation2 + $0x120] sm:$0xff]
    %v109 = vld [vmem:[#allocation2 + $0x128] sm:$0xff]
    %v110 = vld [vmem:[#allocation2 + $0x130] sm:$0xff]
    %v111 = vld [vmem:[#allocation2 + $0x138] sm:$0xff]
    %v112 = vld [vmem:[#allocation2 + $0x140] sm:$0xff]
    %v113 = vld [vmem:[#allocation2 + $0x148] sm:$0xff]
    %v114 = vld [vmem:[#allocation2 + $0x150] sm:$0xff]
    %v115 = vld [vmem:[#allocation2 + $0x158] sm:$0xff]
    %v116 = vld [vmem:[#allocation2 + $0x160] sm:$0xff]
    %v117 = vld [vmem:[#allocation2 + $0x168] sm:$0xff]
    %v118 = vld [vmem:[#allocation2 + $0x170] sm:$0xff]
    %v119 = vld [vmem:[#allocation2 + $0x178] sm:$0xff]
    %v120 = vld [vmem:[#allocation2 + $0x180] sm:$0xff]
    %v121 = vld [vmem:[#allocation2 + $0x188] sm:$0xff]
    %v122 = vld [vmem:[#allocation2 + $0x190] sm:$0xff]
    %v123 = vld [vmem:[#allocation2 + $0x198] sm:$0xff]
    %v124 = vld [vmem:[#allocation2 + $0x1a0] sm:$0xff]
    %v125 = vld [vmem:[#allocation2 + $0x1a8] sm:$0xff]
    %v126 = vld [vmem:[#allocation2 + $0x1b0] sm:$0xff]
    %v127 = vld [vmem:[#allocation2 + $0x1b8] sm:$0xff]
    %v128 = vld [vmem:[#allocation2 + $0x1c0] sm:$0xff]
    %v129 = vld [vmem:[#allocation2 + $0x1c8] sm:$0xff]
    %v130 = vld [vmem:[#allocation2 + $0x1d0] sm:$0xff]
    %v131 = vld [vmem:[#allocation2 + $0x1d8] sm:$0xff]
    %v132 = vld [vmem:[#allocation2 + $0x1e0] sm:$0xff]
    %v133 = vld [vmem:[#allocation2 + $0x1e8] sm:$0xff]
    %v134 = vld [vmem:[#allocation2 + $0x1f0] sm:$0xff]
    %v135 = vld [vmem:[#allocation2 + $0x1f8] sm:$0xff]
    %v137 = vperm.slane %v65, 0
    %v138 = vperm.slane %v65, 1
    %v139 = vperm.slane %v65, 2
    %v140 = vperm.slane %v65, 3
    %v209 = vunpack.c.l.b16 %v72
    %v210 = vunpack.c.h.b16 %v72
    %v211 = vunpack.c.l.b16 %v73
    %v212 = vunpack.c.h.b16 %v73
    %v213 = vunpack.c.l.b16 %v74
    %v214 = vunpack.c.h.b16 %v74
    %v215 = vunpack.c.l.b16 %v75
    %v216 = vunpack.c.h.b16 %v75
    %v217 = vunpack.c.l.b16 %v76
    %v218 = vunpack.c.h.b16 %v76
    %v219 = vunpack.c.l.b16 %v77
    %v220 = vunpack.c.h.b16 %v77
    %v221 = vunpack.c.l.b16 %v78
    %v222 = vunpack.c.h.b16 %v78
    %v223 = vunpack.c.l.b16 %v79
    %v224 = vunpack.c.h.b16 %v79
    %v225 = vunpack.c.l.b16 %v80
    %v226 = vunpack.c.h.b16 %v80
    %v227 = vunpack.c.l.b16 %v81
    %v228 = vunpack.c.h.b16 %v81
    %v229 = vunpack.c.l.b16 %v82
    %v230 = vunpack.c.h.b16 %v82
    %v231 = vunpack.c.l.b16 %v83
    %v232 = vunpack.c.h.b16 %v83
    %v233 = vunpack.c.l.b16 %v84
    %v234 = vunpack.c.h.b16 %v84
    %v235 = vunpack.c.l.b16 %v85
    %v236 = vunpack.c.h.b16 %v85
    %v237 = vunpack.c.l.b16 %v86
    %v238 = vunpack.c.h.b16 %v86
    %v239 = vunpack.c.l.b16 %v87
    %v240 = vunpack.c.h.b16 %v87
    %v241 = vunpack.c.l.b16 %v88
    %v242 = vunpack.c.h.b16 %v88
    %v243 = vunpack.c.l.b16 %v89
    %v244 = vunpack.c.h.b16 %v89
    %v245 = vunpack.c.l.b16 %v90
    %v246 = vunpack.c.h.b16 %v90
    %v247 = vunpack.c.l.b16 %v91
    %v248 = vunpack.c.h.b16 %v91
    %v249 = vunpack.c.l.b16 %v92
    %v250 = vunpack.c.h.b16 %v92
    %v251 = vunpack.c.l.b16 %v93
    %v252 = vunpack.c.h.b16 %v93
    %v253 = vunpack.c.l.b16 %v94
    %v254 = vunpack.c.h.b16 %v94
    %v255 = vunpack.c.l.b16 %v95
    %v256 = vunpack.c.h.b16 %v95
    %v257 = vunpack.c.l.b16 %v96
    %v258 = vunpack.c.h.b16 %v96
    %v259 = vunpack.c.l.b16 %v97
    %v260 = vunpack.c.h.b16 %v97
    %v261 = vunpack.c.l.b16 %v98
    %v262 = vunpack.c.h.b16 %v98
    %v263 = vunpack.c.l.b16 %v99
    %v264 = vunpack.c.h.b16 %v99
    %v265 = vunpack.c.l.b16 %v100
    %v266 = vunpack.c.h.b16 %v100
    %v267 = vunpack.c.l.b16 %v101
    %v268 = vunpack.c.h.b16 %v101
    %v269 = vunpack.c.l.b16 %v102
    %v270 = vunpack.c.h.b16 %v102
    %v271 = vunpack.c.l.b16 %v103
    %v272 = vunpack.c.h.b16 %v103
    %v273 = vunpack.c.l.b16 %v104
    %v274 = vunpack.c.h.b16 %v104
    %v275 = vunpack.c.l.b16 %v105
    %v276 = vunpack.c.h.b16 %v105
    %v277 = vunpack.c.l.b16 %v106
    %v278 = vunpack.c.h.b16 %v106
    %v279 = vunpack.c.l.b16 %v107
    %v280 = vunpack.c.h.b16 %v107
    %v281 = vunpack.c.l.b16 %v108
    %v282 = vunpack.c.h.b16 %v108
    %v283 = vunpack.c.l.b16 %v109
    %v284 = vunpack.c.h.b16 %v109
    %v285 = vunpack.c.l.b16 %v110
    %v286 = vunpack.c.h.b16 %v110
    %v287 = vunpack.c.l.b16 %v111
    %v288 = vunpack.c.h.b16 %v111
    %v289 = vunpack.c.l.b16 %v112
    %v290 = vunpack.c.h.b16 %v112
    %v291 = vunpack.c.l.b16 %v113
    %v292 = vunpack.c.h.b16 %v113
    %v293 = vunpack.c.l.b16 %v114
    %v294 = vunpack.c.h.b16 %v114
    %v295 = vunpack.c.l.b16 %v115
    %v296 = vunpack.c.h.b16 %v115
    %v297 = vunpack.c.l.b16 %v116
    %v298 = vunpack.c.h.b16 %v116
    %v299 = vunpack.c.l.b16 %v117
    %v300 = vunpack.c.h.b16 %v117
    %v301 = vunpack.c.l.b16 %v118
    %v302 = vunpack.c.h.b16 %v118
    %v303 = vunpack.c.l.b16 %v119
    %v304 = vunpack.c.h.b16 %v119
    %v305 = vunpack.c.l.b16 %v120
    %v306 = vunpack.c.h.b16 %v120
    %v307 = vunpack.c.l.b16 %v121
    %v308 = vunpack.c.h.b16 %v121
    %v309 = vunpack.c.l.b16 %v122
    %v310 = vunpack.c.h.b16 %v122
    %v311 = vunpack.c.l.b16 %v123
    %v312 = vunpack.c.h.b16 %v123
    %v313 = vunpack.c.l.b16 %v124
    %v314 = vunpack.c.h.b16 %v124
    %v315 = vunpack.c.l.b16 %v125
    %v316 = vunpack.c.h.b16 %v125
    %v317 = vunpack.c.l.b16 %v126
    %v318 = vunpack.c.h.b16 %v126
    %v319 = vunpack.c.l.b16 %v127
    %v320 = vunpack.c.h.b16 %v127
    %v321 = vunpack.c.l.b16 %v128
    %v322 = vunpack.c.h.b16 %v128
    %v323 = vunpack.c.l.b16 %v129
    %v324 = vunpack.c.h.b16 %v129
    %v325 = vunpack.c.l.b16 %v130
    %v326 = vunpack.c.h.b16 %v130
    %v327 = vunpack.c.l.b16 %v131
    %v328 = vunpack.c.h.b16 %v131
    %v329 = vunpack.c.l.b16 %v132
    %v330 = vunpack.c.h.b16 %v132
    %v331 = vunpack.c.l.b16 %v133
    %v332 = vunpack.c.h.b16 %v133
    %v333 = vunpack.c.l.b16 %v134
    %v334 = vunpack.c.h.b16 %v134
    %v335 = vunpack.c.l.b16 %v135
    %v336 = vunpack.c.h.b16 %v135
    %v337 = vpack.c.b16 %v213, %v209
    %v338 = vpack.c.b16 %v214, %v210
    %v339 = vpack.c.b16 %v215, %v211
    %v340 = vpack.c.b16 %v216, %v212
    %v341 = vpack.c.b16 %v221, %v217
    %v342 = vpack.c.b16 %v222, %v218
    %v343 = vpack.c.b16 %v223, %v219
    %v344 = vpack.c.b16 %v224, %v220
    %v345 = vpack.c.b16 %v229, %v225
    %v346 = vpack.c.b16 %v230, %v226
    %v347 = vpack.c.b16 %v231, %v227
    %v348 = vpack.c.b16 %v232, %v228
    %v349 = vpack.c.b16 %v237, %v233
    %v350 = vpack.c.b16 %v238, %v234
    %v351 = vpack.c.b16 %v239, %v235
    %v352 = vpack.c.b16 %v240, %v236
    %v353 = vpack.c.b16 %v245, %v241
    %v354 = vpack.c.b16 %v246, %v242
    %v355 = vpack.c.b16 %v247, %v243
    %v356 = vpack.c.b16 %v248, %v244
    %v357 = vpack.c.b16 %v253, %v249
    %v358 = vpack.c.b16 %v254, %v250
    %v359 = vpack.c.b16 %v255, %v251
    %v360 = vpack.c.b16 %v256, %v252
    %v361 = vpack.c.b16 %v261, %v257
    %v362 = vpack.c.b16 %v262, %v258
    %v363 = vpack.c.b16 %v263, %v259
    %v364 = vpack.c.b16 %v264, %v260
    %v365 = vpack.c.b16 %v269, %v265
    %v366 = vpack.c.b16 %v270, %v266
    %v367 = vpack.c.b16 %v271, %v267
    %v368 = vpack.c.b16 %v272, %v268
    %v369 = vpack.c.b16 %v277, %v273
    %v370 = vpack.c.b16 %v278, %v274
    %v371 = vpack.c.b16 %v279, %v275
    %v372 = vpack.c.b16 %v280, %v276
    %v373 = vpack.c.b16 %v285, %v281
    %v374 = vpack.c.b16 %v286, %v282
    %v375 = vpack.c.b16 %v287, %v283
    %v376 = vpack.c.b16 %v288, %v284
    %v377 = vpack.c.b16 %v293, %v289
    %v378 = vpack.c.b16 %v294, %v290
    %v379 = vpack.c.b16 %v295, %v291
    %v380 = vpack.c.b16 %v296, %v292
    %v381 = vpack.c.b16 %v301, %v297
    %v382 = vpack.c.b16 %v302, %v298
    %v383 = vpack.c.b16 %v303, %v299
    %v384 = vpack.c.b16 %v304, %v300
    %v385 = vpack.c.b16 %v309, %v305
    %v386 = vpack.c.b16 %v310, %v306
    %v387 = vpack.c.b16 %v311, %v307
    %v388 = vpack.c.b16 %v312, %v308
    %v389 = vpack.c.b16 %v317, %v313
    %v390 = vpack.c.b16 %v318, %v314
    %v391 = vpack.c.b16 %v319, %v315
    %v392 = vpack.c.b16 %v320, %v316
    %v393 = vpack.c.b16 %v325, %v321
    %v394 = vpack.c.b16 %v326, %v322
    %v395 = vpack.c.b16 %v327, %v323
    %v396 = vpack.c.b16 %v328, %v324
    %v397 = vpack.c.b16 %v333, %v329
    %v398 = vpack.c.b16 %v334, %v330
    %v399 = vpack.c.b16 %v335, %v331
    %v400 = vpack.c.b16 %v336, %v332
    %465 = vmatpush.bf16.msra.mxu0 %v365
    %466 = vmatpush.bf16.msra.mxu0 %v361
    %467 = vmatpush.bf16.msra.mxu0 %v357
    %468 = vmatpush.bf16.msra.mxu0 %v353
    %469 = vmatpush.bf16.msra.mxu0 %v349
    %470 = vmatpush.bf16.msra.mxu0 %v345
    %471 = vmatpush.bf16.msra.mxu0 %v341
    %472 = vmatpush.bf16.msra.mxu0 %v337
    %473 = vmatmul.bf16.gmra.mxu0 %v70
    %v474 = vpop.f32.mrf.mxu0
    %v475 = vadd.f32 %v137, %v474
    %v476 = vpop.f32.mrf.mxu0
    %477 = vdwg.mxu0
    %478 = vmatpush.bf16.msra.mxu0 %v397
    %479 = vmatpush.bf16.msra.mxu0 %v393
    %480 = vmatpush.bf16.msra.mxu0 %v389
    %481 = vmatpush.bf16.msra.mxu0 %v385
    %482 = vmatpush.bf16.msra.mxu0 %v381
    %483 = vmatpush.bf16.msra.mxu0 %v377
    %484 = vmatpush.bf16.msra.mxu0 %v373
    %485 = vmatpush.bf16.msra.mxu0 %v369
    %486 = vmatmul.bf16.gmra.mxu0 %v71
    %v487 = vpop.f32.mrf.mxu0
    %v488 = vadd.f32 %v475, %v487
    %v489 = vpop.f32.mrf.mxu0
    %490 = vdwg.mxu0
    %491 = vmatpush.bf16.msra.mxu0 %v366
    %492 = vmatpush.bf16.msra.mxu0 %v362
    %493 = vmatpush.bf16.msra.mxu0 %v358
    %494 = vmatpush.bf16.msra.mxu0 %v354
    %495 = vmatpush.bf16.msra.mxu0 %v350
    %496 = vmatpush.bf16.msra.mxu0 %v346
    %497 = vmatpush.bf16.msra.mxu0 %v342
    %498 = vmatpush.bf16.msra.mxu0 %v338
    %499 = vmatmul.bf16.gmra.mxu0 %v70
    %v500 = vpop.f32.mrf.mxu0
    %v501 = vadd.f32 %v138, %v500
    %v502 = vpop.f32.mrf.mxu0
    %503 = vdwg.mxu0
    %504 = vmatpush.bf16.msra.mxu0 %v398
    %505 = vmatpush.bf16.msra.mxu0 %v394
    %506 = vmatpush.bf16.msra.mxu0 %v390
    %507 = vmatpush.bf16.msra.mxu0 %v386
    %508 = vmatpush.bf16.msra.mxu0 %v382
    %509 = vmatpush.bf16.msra.mxu0 %v378
    %510 = vmatpush.bf16.msra.mxu0 %v374
    %511 = vmatpush.bf16.msra.mxu0 %v370
    %512 = vmatmul.bf16.gmra.mxu0 %v71
    %v513 = vpop.f32.mrf.mxu0
    %v514 = vadd.f32 %v501, %v513
    %v515 = vpop.f32.mrf.mxu0
    %516 = vdwg.mxu0
    %517 = vmatpush.bf16.msra.mxu0 %v367
    %518 = vmatpush.bf16.msra.mxu0 %v363
    %519 = vmatpush.bf16.msra.mxu0 %v359
    %520 = vmatpush.bf16.msra.mxu0 %v355
    %521 = vmatpush.bf16.msra.mxu0 %v351
    %522 = vmatpush.bf16.msra.mxu0 %v347
    %523 = vmatpush.bf16.msra.mxu0 %v343
    %524 = vmatpush.bf16.msra.mxu0 %v339
    %525 = vmatmul.bf16.gmra.mxu0 %v70
    %v526 = vpop.f32.mrf.mxu0
    %v527 = vadd.f32 %v139, %v526
    %v528 = vpop.f32.mrf.mxu0
    %529 = vdwg.mxu0
    %530 = vmatpush.bf16.msra.mxu0 %v399
    %531 = vmatpush.bf16.msra.mxu0 %v395
    %532 = vmatpush.bf16.msra.mxu0 %v391
    %533 = vmatpush.bf16.msra.mxu0 %v387
    %534 = vmatpush.bf16.msra.mxu0 %v383
    %535 = vmatpush.bf16.msra.mxu0 %v379
    %536 = vmatpush.bf16.msra.mxu0 %v375
    %537 = vmatpush.bf16.msra.mxu0 %v371
    %538 = vmatmul.bf16.gmra.mxu0 %v71
    %v539 = vpop.f32.mrf.mxu0
    %v540 = vadd.f32 %v527, %v539
    %v541 = vpop.f32.mrf.mxu0
    %542 = vdwg.mxu0
    %543 = vmatpush.bf16.msra.mxu0 %v368
    %544 = vmatpush.bf16.msra.mxu0 %v364
    %545 = vmatpush.bf16.msra.mxu0 %v360
    %546 = vmatpush.bf16.msra.mxu0 %v356
    %547 = vmatpush.bf16.msra.mxu0 %v352
    %548 = vmatpush.bf16.msra.mxu0 %v348
    %549 = vmatpush.bf16.msra.mxu0 %v344
    %550 = vmatpush.bf16.msra.mxu0 %v340
    %551 = vmatmul.bf16.gmra.mxu0 %v70
    %v552 = vpop.f32.mrf.mxu0
    %v553 = vadd.f32 %v140, %v552
    %v554 = vpop.f32.mrf.mxu0
    %555 = vdwg.mxu0
    %556 = vmatpush.bf16.msra.mxu0 %v400
    %557 = vmatpush.bf16.msra.mxu0 %v396
    %558 = vmatpush.bf16.msra.mxu0 %v392
    %559 = vmatpush.bf16.msra.mxu0 %v388
    %560 = vmatpush.bf16.msra.mxu0 %v384
    %561 = vmatpush.bf16.msra.mxu0 %v380
    %562 = vmatpush.bf16.msra.mxu0 %v376
    %563 = vmatpush.bf16.msra.mxu0 %v372
    %564 = vmatmul.bf16.gmra.mxu0 %v71
    %v565 = vpop.f32.mrf.mxu0
    %v566 = vadd.f32 %v553, %v565
    %v567 = vpop.f32.mrf.mxu0
    %568 = vdwg.mxu0
    %vm569 = vcmp.gt.f32.partialorder %v488, 0.0
    %vm570 = vcmp.gt.f32.partialorder %v514, 0.0
    %vm571 = vcmp.gt.f32.partialorder %v540, 0.0
    %vm572 = vcmp.gt.f32.partialorder %v566, 0.0
    %v573 = vmul.f32 %v488, 0.2
    %v574 = vmul.f32 %v514, 0.2
    %v575 = vmul.f32 %v540, 0.2
    %v576 = vmul.f32 %v566, 0.2
    %v577 = vsel %vm569, %v488, %v573
    %v578 = vsel %vm570, %v514, %v574
    %v579 = vsel %vm571, %v540, %v575
    %v580 = vsel %vm572, %v566, %v576
    %v581 = vpack.c.bf16 %v577, %v577
    %v582 = vpack.c.bf16 %v578, %v578
    %v583 = vpack.c.bf16 %v579, %v579
    %v584 = vpack.c.bf16 %v580, %v580
    %v585 = vld [vmem:[#allocation5] sm:$0xff]
    %v586 = vld [vmem:[#allocation5 + $0x8] sm:$0xff]
    %v587 = vld [vmem:[#allocation5 + $0x10] sm:$0xff]
    %v588 = vld [vmem:[#allocation5 + $0x18] sm:$0xff]
    %v589 = vld [vmem:[#allocation5 + $0x20] sm:$0xff]
    %v590 = vld [vmem:[#allocation5 + $0x28] sm:$0xff]
    %v591 = vld [vmem:[#allocation5 + $0x30] sm:$0xff]
    %v592 = vld [vmem:[#allocation5 + $0x38] sm:$0xff]
    %v593 = vld [vmem:[#allocation5 + $0x40] sm:$0xff]
    %v594 = vld [vmem:[#allocation5 + $0x48] sm:$0xff]
    %v595 = vld [vmem:[#allocation5 + $0x50] sm:$0xff]
    %v596 = vld [vmem:[#allocation5 + $0x58] sm:$0xff]
    %v597 = vld [vmem:[#allocation5 + $0x60] sm:$0xff]
    %v598 = vld [vmem:[#allocation5 + $0x68] sm:$0xff]
    %v599 = vld [vmem:[#allocation5 + $0x70] sm:$0xff]
    %v600 = vld [vmem:[#allocation5 + $0x78] sm:$0xff]
    %v601 = vld [vmem:[#allocation5 + $0x80] sm:$0xff]
    %v602 = vld [vmem:[#allocation5 + $0x88] sm:$0xff]
    %v603 = vld [vmem:[#allocation5 + $0x90] sm:$0xff]
    %v604 = vld [vmem:[#allocation5 + $0x98] sm:$0xff]
    %v605 = vld [vmem:[#allocation5 + $0xa0] sm:$0xff]
    %v606 = vld [vmem:[#allocation5 + $0xa8] sm:$0xff]
    %v607 = vld [vmem:[#allocation5 + $0xb0] sm:$0xff]
    %v608 = vld [vmem:[#allocation5 + $0xb8] sm:$0xff]
    %v609 = vld [vmem:[#allocation5 + $0xc0] sm:$0xff]
    %v610 = vld [vmem:[#allocation5 + $0xc8] sm:$0xff]
    %v611 = vld [vmem:[#allocation5 + $0xd0] sm:$0xff]
    %v612 = vld [vmem:[#allocation5 + $0xd8] sm:$0xff]
    %v613 = vld [vmem:[#allocation5 + $0xe0] sm:$0xff]
    %v614 = vld [vmem:[#allocation5 + $0xe8] sm:$0xff]
    %v615 = vld [vmem:[#allocation5 + $0xf0] sm:$0xff]
    %v616 = vld [vmem:[#allocation5 + $0xf8] sm:$0xff]
    %v617 = vld [vmem:[#allocation5 + $0x100] sm:$0xff]
    %v618 = vld [vmem:[#allocation5 + $0x108] sm:$0xff]
    %v619 = vld [vmem:[#allocation5 + $0x110] sm:$0xff]
    %v620 = vld [vmem:[#allocation5 + $0x118] sm:$0xff]
    %v621 = vld [vmem:[#allocation5 + $0x120] sm:$0xff]
    %v622 = vld [vmem:[#allocation5 + $0x128] sm:$0xff]
    %v623 = vld [vmem:[#allocation5 + $0x130] sm:$0xff]
    %v624 = vld [vmem:[#allocation5 + $0x138] sm:$0xff]
    %v625 = vld [vmem:[#allocation5 + $0x140] sm:$0xff]
    %v626 = vld [vmem:[#allocation5 + $0x148] sm:$0xff]
    %v627 = vld [vmem:[#allocation5 + $0x150] sm:$0xff]
    %v628 = vld [vmem:[#allocation5 + $0x158] sm:$0xff]
    %v629 = vld [vmem:[#allocation5 + $0x160] sm:$0xff]
    %v630 = vld [vmem:[#allocation5 + $0x168] sm:$0xff]
    %v631 = vld [vmem:[#allocation5 + $0x170] sm:$0xff]
    %v632 = vld [vmem:[#allocation5 + $0x178] sm:$0xff]
    %v633 = vld [vmem:[#allocation5 + $0x180] sm:$0xff]
    %v634 = vld [vmem:[#allocation5 + $0x188] sm:$0xff]
    %v635 = vld [vmem:[#allocation5 + $0x190] sm:$0xff]
    %v636 = vld [vmem:[#allocation5 + $0x198] sm:$0xff]
    %v637 = vld [vmem:[#allocation5 + $0x1a0] sm:$0xff]
    %v638 = vld [vmem:[#allocation5 + $0x1a8] sm:$0xff]
    %v639 = vld [vmem:[#allocation5 + $0x1b0] sm:$0xff]
    %v640 = vld [vmem:[#allocation5 + $0x1b8] sm:$0xff]
    %v641 = vld [vmem:[#allocation5 + $0x1c0] sm:$0xff]
    %v642 = vld [vmem:[#allocation5 + $0x1c8] sm:$0xff]
    %v643 = vld [vmem:[#allocation5 + $0x1d0] sm:$0xff]
    %v644 = vld [vmem:[#allocation5 + $0x1d8] sm:$0xff]
    %v645 = vld [vmem:[#allocation5 + $0x1e0] sm:$0xff]
    %v646 = vld [vmem:[#allocation5 + $0x1e8] sm:$0xff]
    %v647 = vld [vmem:[#allocation5 + $0x1f0] sm:$0xff]
    %v648 = vld [vmem:[#allocation5 + $0x1f8] sm:$0xff]
    %v649 = vld [vmem:[#allocation5 + $0x200] sm:$0xff]
    %v650 = vld [vmem:[#allocation5 + $0x208] sm:$0xff]
    %v651 = vld [vmem:[#allocation5 + $0x210] sm:$0xff]
    %v652 = vld [vmem:[#allocation5 + $0x218] sm:$0xff]
    %v653 = vld [vmem:[#allocation5 + $0x220] sm:$0xff]
    %v654 = vld [vmem:[#allocation5 + $0x228] sm:$0xff]
    %v655 = vld [vmem:[#allocation5 + $0x230] sm:$0xff]
    %v656 = vld [vmem:[#allocation5 + $0x238] sm:$0xff]
    %v657 = vld [vmem:[#allocation5 + $0x240] sm:$0xff]
    %v658 = vld [vmem:[#allocation5 + $0x248] sm:$0xff]
    %v659 = vld [vmem:[#allocation5 + $0x250] sm:$0xff]
    %v660 = vld [vmem:[#allocation5 + $0x258] sm:$0xff]
    %v661 = vld [vmem:[#allocation5 + $0x260] sm:$0xff]
    %v662 = vld [vmem:[#allocation5 + $0x268] sm:$0xff]
    %v663 = vld [vmem:[#allocation5 + $0x270] sm:$0xff]
    %v664 = vld [vmem:[#allocation5 + $0x278] sm:$0xff]
    %v665 = vld [vmem:[#allocation5 + $0x280] sm:$0xff]
    %v666 = vld [vmem:[#allocation5 + $0x288] sm:$0xff]
    %v667 = vld [vmem:[#allocation5 + $0x290] sm:$0xff]
    %v668 = vld [vmem:[#allocation5 + $0x298] sm:$0xff]
    %v669 = vld [vmem:[#allocation5 + $0x2a0] sm:$0xff]
    %v670 = vld [vmem:[#allocation5 + $0x2a8] sm:$0xff]
    %v671 = vld [vmem:[#allocation5 + $0x2b0] sm:$0xff]
    %v672 = vld [vmem:[#allocation5 + $0x2b8] sm:$0xff]
    %v673 = vld [vmem:[#allocation5 + $0x2c0] sm:$0xff]
    %v674 = vld [vmem:[#allocation5 + $0x2c8] sm:$0xff]
    %v675 = vld [vmem:[#allocation5 + $0x2d0] sm:$0xff]
    %v676 = vld [vmem:[#allocation5 + $0x2d8] sm:$0xff]
    %v677 = vld [vmem:[#allocation5 + $0x2e0] sm:$0xff]
    %v678 = vld [vmem:[#allocation5 + $0x2e8] sm:$0xff]
    %v679 = vld [vmem:[#allocation5 + $0x2f0] sm:$0xff]
    %v680 = vld [vmem:[#allocation5 + $0x2f8] sm:$0xff]
    %v681 = vld [vmem:[#allocation5 + $0x300] sm:$0xff]
    %v682 = vld [vmem:[#allocation5 + $0x308] sm:$0xff]
    %v683 = vld [vmem:[#allocation5 + $0x310] sm:$0xff]
    %v684 = vld [vmem:[#allocation5 + $0x318] sm:$0xff]
    %v685 = vld [vmem:[#allocation5 + $0x320] sm:$0xff]
    %v686 = vld [vmem:[#allocation5 + $0x328] sm:$0xff]
    %v687 = vld [vmem:[#allocation5 + $0x330] sm:$0xff]
    %v688 = vld [vmem:[#allocation5 + $0x338] sm:$0xff]
    %v689 = vld [vmem:[#allocation5 + $0x340] sm:$0xff]
    %v690 = vld [vmem:[#allocation5 + $0x348] sm:$0xff]
    %v691 = vld [vmem:[#allocation5 + $0x350] sm:$0xff]
    %v692 = vld [vmem:[#allocation5 + $0x358] sm:$0xff]
    %v693 = vld [vmem:[#allocation5 + $0x360] sm:$0xff]
    %v694 = vld [vmem:[#allocation5 + $0x368] sm:$0xff]
    %v695 = vld [vmem:[#allocation5 + $0x370] sm:$0xff]
    %v696 = vld [vmem:[#allocation5 + $0x378] sm:$0xff]
    %v697 = vld [vmem:[#allocation5 + $0x380] sm:$0xff]
    %v698 = vld [vmem:[#allocation5 + $0x388] sm:$0xff]
    %v699 = vld [vmem:[#allocation5 + $0x390] sm:$0xff]
    %v700 = vld [vmem:[#allocation5 + $0x398] sm:$0xff]
    %v701 = vld [vmem:[#allocation5 + $0x3a0] sm:$0xff]
    %v702 = vld [vmem:[#allocation5 + $0x3a8] sm:$0xff]
    %v703 = vld [vmem:[#allocation5 + $0x3b0] sm:$0xff]
    %v704 = vld [vmem:[#allocation5 + $0x3b8] sm:$0xff]
    %v705 = vld [vmem:[#allocation5 + $0x3c0] sm:$0xff]
    %v706 = vld [vmem:[#allocation5 + $0x3c8] sm:$0xff]
    %v707 = vld [vmem:[#allocation5 + $0x3d0] sm:$0xff]
    %v708 = vld [vmem:[#allocation5 + $0x3d8] sm:$0xff]
    %v709 = vld [vmem:[#allocation5 + $0x3e0] sm:$0xff]
    %v710 = vld [vmem:[#allocation5 + $0x3e8] sm:$0xff]
    %v711 = vld [vmem:[#allocation5 + $0x3f0] sm:$0xff]
    %v712 = vld [vmem:[#allocation5 + $0x3f8] sm:$0xff]
    %v841 = vunpack.c.l.b16 %v585
    %v842 = vunpack.c.h.b16 %v585
    %v843 = vunpack.c.l.b16 %v586
    %v844 = vunpack.c.h.b16 %v586
    %v845 = vunpack.c.l.b16 %v587
    %v846 = vunpack.c.h.b16 %v587
    %v847 = vunpack.c.l.b16 %v588
    %v848 = vunpack.c.h.b16 %v588
    %v849 = vunpack.c.l.b16 %v589
    %v850 = vunpack.c.h.b16 %v589
    %v851 = vunpack.c.l.b16 %v590
    %v852 = vunpack.c.h.b16 %v590
    %v853 = vunpack.c.l.b16 %v591
    %v854 = vunpack.c.h.b16 %v591
    %v855 = vunpack.c.l.b16 %v592
    %v856 = vunpack.c.h.b16 %v592
    %v857 = vunpack.c.l.b16 %v593
    %v858 = vunpack.c.h.b16 %v593
    %v859 = vunpack.c.l.b16 %v594
    %v860 = vunpack.c.h.b16 %v594
    %v861 = vunpack.c.l.b16 %v595
    %v862 = vunpack.c.h.b16 %v595
    %v863 = vunpack.c.l.b16 %v596
    %v864 = vunpack.c.h.b16 %v596
    %v865 = vunpack.c.l.b16 %v597
    %v866 = vunpack.c.h.b16 %v597
    %v867 = vunpack.c.l.b16 %v598
    %v868 = vunpack.c.h.b16 %v598
    %v869 = vunpack.c.l.b16 %v599
    %v870 = vunpack.c.h.b16 %v599
    %v871 = vunpack.c.l.b16 %v600
    %v872 = vunpack.c.h.b16 %v600
    %v873 = vunpack.c.l.b16 %v601
    %v874 = vunpack.c.h.b16 %v601
    %v875 = vunpack.c.l.b16 %v602
    %v876 = vunpack.c.h.b16 %v602
    %v877 = vunpack.c.l.b16 %v603
    %v878 = vunpack.c.h.b16 %v603
    %v879 = vunpack.c.l.b16 %v604
    %v880 = vunpack.c.h.b16 %v604
    %v881 = vunpack.c.l.b16 %v605
    %v882 = vunpack.c.h.b16 %v605
    %v883 = vunpack.c.l.b16 %v606
    %v884 = vunpack.c.h.b16 %v606
    %v885 = vunpack.c.l.b16 %v607
    %v886 = vunpack.c.h.b16 %v607
    %v887 = vunpack.c.l.b16 %v608
    %v888 = vunpack.c.h.b16 %v608
    %v889 = vunpack.c.l.b16 %v609
    %v890 = vunpack.c.h.b16 %v609
    %v891 = vunpack.c.l.b16 %v610
    %v892 = vunpack.c.h.b16 %v610
    %v893 = vunpack.c.l.b16 %v611
    %v894 = vunpack.c.h.b16 %v611
    %v895 = vunpack.c.l.b16 %v612
    %v896 = vunpack.c.h.b16 %v612
    %v897 = vunpack.c.l.b16 %v613
    %v898 = vunpack.c.h.b16 %v613
    %v899 = vunpack.c.l.b16 %v614
    %v900 = vunpack.c.h.b16 %v614
    %v901 = vunpack.c.l.b16 %v615
    %v902 = vunpack.c.h.b16 %v615
    %v903 = vunpack.c.l.b16 %v616
    %v904 = vunpack.c.h.b16 %v616
    %v905 = vunpack.c.l.b16 %v617
    %v906 = vunpack.c.h.b16 %v617
    %v907 = vunpack.c.l.b16 %v618
    %v908 = vunpack.c.h.b16 %v618
    %v909 = vunpack.c.l.b16 %v619
    %v910 = vunpack.c.h.b16 %v619
    %v911 = vunpack.c.l.b16 %v620
    %v912 = vunpack.c.h.b16 %v620
    %v913 = vunpack.c.l.b16 %v621
    %v914 = vunpack.c.h.b16 %v621
    %v915 = vunpack.c.l.b16 %v622
    %v916 = vunpack.c.h.b16 %v622
    %v917 = vunpack.c.l.b16 %v623
    %v918 = vunpack.c.h.b16 %v623
    %v919 = vunpack.c.l.b16 %v624
    %v920 = vunpack.c.h.b16 %v624
    %v921 = vunpack.c.l.b16 %v625
    %v922 = vunpack.c.h.b16 %v625
    %v923 = vunpack.c.l.b16 %v626
    %v924 = vunpack.c.h.b16 %v626
    %v925 = vunpack.c.l.b16 %v627
    %v926 = vunpack.c.h.b16 %v627
    %v927 = vunpack.c.l.b16 %v628
    %v928 = vunpack.c.h.b16 %v628
    %v929 = vunpack.c.l.b16 %v629
    %v930 = vunpack.c.h.b16 %v629
    %v931 = vunpack.c.l.b16 %v630
    %v932 = vunpack.c.h.b16 %v630
    %v933 = vunpack.c.l.b16 %v631
    %v934 = vunpack.c.h.b16 %v631
    %v935 = vunpack.c.l.b16 %v632
    %v936 = vunpack.c.h.b16 %v632
    %v937 = vunpack.c.l.b16 %v633
    %v938 = vunpack.c.h.b16 %v633
    %v939 = vunpack.c.l.b16 %v634
    %v940 = vunpack.c.h.b16 %v634
    %v941 = vunpack.c.l.b16 %v635
    %v942 = vunpack.c.h.b16 %v635
    %v943 = vunpack.c.l.b16 %v636
    %v944 = vunpack.c.h.b16 %v636
    %v945 = vunpack.c.l.b16 %v637
    %v946 = vunpack.c.h.b16 %v637
    %v947 = vunpack.c.l.b16 %v638
    %v948 = vunpack.c.h.b16 %v638
    %v949 = vunpack.c.l.b16 %v639
    %v950 = vunpack.c.h.b16 %v639
    %v951 = vunpack.c.l.b16 %v640
    %v952 = vunpack.c.h.b16 %v640
    %v953 = vunpack.c.l.b16 %v641
    %v954 = vunpack.c.h.b16 %v641
    %v955 = vunpack.c.l.b16 %v642
    %v956 = vunpack.c.h.b16 %v642
    %v957 = vunpack.c.l.b16 %v643
    %v958 = vunpack.c.h.b16 %v643
    %v959 = vunpack.c.l.b16 %v644
    %v960 = vunpack.c.h.b16 %v644
    %v961 = vunpack.c.l.b16 %v645
    %v962 = vunpack.c.h.b16 %v645
    %v963 = vunpack.c.l.b16 %v646
    %v964 = vunpack.c.h.b16 %v646
    %v965 = vunpack.c.l.b16 %v647
    %v966 = vunpack.c.h.b16 %v647
    %v967 = vunpack.c.l.b16 %v648
    %v968 = vunpack.c.h.b16 %v648
    %v969 = vunpack.c.l.b16 %v649
    %v970 = vunpack.c.h.b16 %v649
    %v971 = vunpack.c.l.b16 %v650
    %v972 = vunpack.c.h.b16 %v650
    %v973 = vunpack.c.l.b16 %v651
    %v974 = vunpack.c.h.b16 %v651
    %v975 = vunpack.c.l.b16 %v652
    %v976 = vunpack.c.h.b16 %v652
    %v977 = vunpack.c.l.b16 %v653
    %v978 = vunpack.c.h.b16 %v653
    %v979 = vunpack.c.l.b16 %v654
    %v980 = vunpack.c.h.b16 %v654
    %v981 = vunpack.c.l.b16 %v655
    %v982 = vunpack.c.h.b16 %v655
    %v983 = vunpack.c.l.b16 %v656
    %v984 = vunpack.c.h.b16 %v656
    %v985 = vunpack.c.l.b16 %v657
    %v986 = vunpack.c.h.b16 %v657
    %v987 = vunpack.c.l.b16 %v658
    %v988 = vunpack.c.h.b16 %v658
    %v989 = vunpack.c.l.b16 %v659
    %v990 = vunpack.c.h.b16 %v659
    %v991 = vunpack.c.l.b16 %v660
    %v992 = vunpack.c.h.b16 %v660
    %v993 = vunpack.c.l.b16 %v661
    %v994 = vunpack.c.h.b16 %v661
    %v995 = vunpack.c.l.b16 %v662
    %v996 = vunpack.c.h.b16 %v662
    %v997 = vunpack.c.l.b16 %v663
    %v998 = vunpack.c.h.b16 %v663
    %v999 = vunpack.c.l.b16 %v664
    %v1000 = vunpack.c.h.b16 %v664
    %v1001 = vunpack.c.l.b16 %v665
    %v1002 = vunpack.c.h.b16 %v665
    %v1003 = vunpack.c.l.b16 %v666
    %v1004 = vunpack.c.h.b16 %v666
    %v1005 = vunpack.c.l.b16 %v667
    %v1006 = vunpack.c.h.b16 %v667
    %v1007 = vunpack.c.l.b16 %v668
    %v1008 = vunpack.c.h.b16 %v668
    %v1009 = vunpack.c.l.b16 %v669
    %v1010 = vunpack.c.h.b16 %v669
    %v1011 = vunpack.c.l.b16 %v670
    %v1012 = vunpack.c.h.b16 %v670
    %v1013 = vunpack.c.l.b16 %v671
    %v1014 = vunpack.c.h.b16 %v671
    %v1015 = vunpack.c.l.b16 %v672
    %v1016 = vunpack.c.h.b16 %v672
    %v1017 = vunpack.c.l.b16 %v673
    %v1018 = vunpack.c.h.b16 %v673
    %v1019 = vunpack.c.l.b16 %v674
    %v1020 = vunpack.c.h.b16 %v674
    %v1021 = vunpack.c.l.b16 %v675
    %v1022 = vunpack.c.h.b16 %v675
    %v1023 = vunpack.c.l.b16 %v676
    %v1024 = vunpack.c.h.b16 %v676
    %v1025 = vunpack.c.l.b16 %v677
    %v1026 = vunpack.c.h.b16 %v677
    %v1027 = vunpack.c.l.b16 %v678
    %v1028 = vunpack.c.h.b16 %v678
    %v1029 = vunpack.c.l.b16 %v679
    %v1030 = vunpack.c.h.b16 %v679
    %v1031 = vunpack.c.l.b16 %v680
    %v1032 = vunpack.c.h.b16 %v680
    %v1033 = vunpack.c.l.b16 %v681
    %v1034 = vunpack.c.h.b16 %v681
    %v1035 = vunpack.c.l.b16 %v682
    %v1036 = vunpack.c.h.b16 %v682
    %v1037 = vunpack.c.l.b16 %v683
    %v1038 = vunpack.c.h.b16 %v683
    %v1039 = vunpack.c.l.b16 %v684
    %v1040 = vunpack.c.h.b16 %v684
    %v1041 = vunpack.c.l.b16 %v685
    %v1042 = vunpack.c.h.b16 %v685
    %v1043 = vunpack.c.l.b16 %v686
    %v1044 = vunpack.c.h.b16 %v686
    %v1045 = vunpack.c.l.b16 %v687
    %v1046 = vunpack.c.h.b16 %v687
    %v1047 = vunpack.c.l.b16 %v688
    %v1048 = vunpack.c.h.b16 %v688
    %v1049 = vunpack.c.l.b16 %v689
    %v1050 = vunpack.c.h.b16 %v689
    %v1051 = vunpack.c.l.b16 %v690
    %v1052 = vunpack.c.h.b16 %v690
    %v1053 = vunpack.c.l.b16 %v691
    %v1054 = vunpack.c.h.b16 %v691
    %v1055 = vunpack.c.l.b16 %v692
    %v1056 = vunpack.c.h.b16 %v692
    %v1057 = vunpack.c.l.b16 %v693
    %v1058 = vunpack.c.h.b16 %v693
    %v1059 = vunpack.c.l.b16 %v694
    %v1060 = vunpack.c.h.b16 %v694
    %v1061 = vunpack.c.l.b16 %v695
    %v1062 = vunpack.c.h.b16 %v695
    %v1063 = vunpack.c.l.b16 %v696
    %v1064 = vunpack.c.h.b16 %v696
    %v1065 = vunpack.c.l.b16 %v697
    %v1066 = vunpack.c.h.b16 %v697
    %v1067 = vunpack.c.l.b16 %v698
    %v1068 = vunpack.c.h.b16 %v698
    %v1069 = vunpack.c.l.b16 %v699
    %v1070 = vunpack.c.h.b16 %v699
    %v1071 = vunpack.c.l.b16 %v700
    %v1072 = vunpack.c.h.b16 %v700
    %v1073 = vunpack.c.l.b16 %v701
    %v1074 = vunpack.c.h.b16 %v701
    %v1075 = vunpack.c.l.b16 %v702
    %v1076 = vunpack.c.h.b16 %v702
    %v1077 = vunpack.c.l.b16 %v703
    %v1078 = vunpack.c.h.b16 %v703
    %v1079 = vunpack.c.l.b16 %v704
    %v1080 = vunpack.c.h.b16 %v704
    %v1081 = vunpack.c.l.b16 %v705
    %v1082 = vunpack.c.h.b16 %v705
    %v1083 = vunpack.c.l.b16 %v706
    %v1084 = vunpack.c.h.b16 %v706
    %v1085 = vunpack.c.l.b16 %v707
    %v1086 = vunpack.c.h.b16 %v707
    %v1087 = vunpack.c.l.b16 %v708
    %v1088 = vunpack.c.h.b16 %v708
    %v1089 = vunpack.c.l.b16 %v709
    %v1090 = vunpack.c.h.b16 %v709
    %v1091 = vunpack.c.l.b16 %v710
    %v1092 = vunpack.c.h.b16 %v710
    %v1093 = vunpack.c.l.b16 %v711
    %v1094 = vunpack.c.h.b16 %v711
    %v1095 = vunpack.c.l.b16 %v712
    %v1096 = vunpack.c.h.b16 %v712
    %v1097 = vpack.c.b16 %v845, %v841
    %v1098 = vpack.c.b16 %v846, %v842
    %v1099 = vpack.c.b16 %v847, %v843
    %v1100 = vpack.c.b16 %v848, %v844
    %v1101 = vpack.c.b16 %v853, %v849
    %v1102 = vpack.c.b16 %v854, %v850
    %v1103 = vpack.c.b16 %v855, %v851
    %v1104 = vpack.c.b16 %v856, %v852
    %v1105 = vpack.c.b16 %v861, %v857
    %v1106 = vpack.c.b16 %v862, %v858
    %v1107 = vpack.c.b16 %v863, %v859
    %v1108 = vpack.c.b16 %v864, %v860
    %v1109 = vpack.c.b16 %v869, %v865
    %v1110 = vpack.c.b16 %v870, %v866
    %v1111 = vpack.c.b16 %v871, %v867
    %v1112 = vpack.c.b16 %v872, %v868
    %v1113 = vpack.c.b16 %v877, %v873
    %v1114 = vpack.c.b16 %v878, %v874
    %v1115 = vpack.c.b16 %v879, %v875
    %v1116 = vpack.c.b16 %v880, %v876
    %v1117 = vpack.c.b16 %v885, %v881
    %v1118 = vpack.c.b16 %v886, %v882
    %v1119 = vpack.c.b16 %v887, %v883
    %v1120 = vpack.c.b16 %v888, %v884
    %v1121 = vpack.c.b16 %v893, %v889
    %v1122 = vpack.c.b16 %v894, %v890
    %v1123 = vpack.c.b16 %v895, %v891
    %v1124 = vpack.c.b16 %v896, %v892
    %v1125 = vpack.c.b16 %v901, %v897
    %v1126 = vpack.c.b16 %v902, %v898
    %v1127 = vpack.c.b16 %v903, %v899
    %v1128 = vpack.c.b16 %v904, %v900
    %v1129 = vpack.c.b16 %v909, %v905
    %v1130 = vpack.c.b16 %v910, %v906
    %v1131 = vpack.c.b16 %v911, %v907
    %v1132 = vpack.c.b16 %v912, %v908
    %v1133 = vpack.c.b16 %v917, %v913
    %v1134 = vpack.c.b16 %v918, %v914
    %v1135 = vpack.c.b16 %v919, %v915
    %v1136 = vpack.c.b16 %v920, %v916
    %v1137 = vpack.c.b16 %v925, %v921
    %v1138 = vpack.c.b16 %v926, %v922
    %v1139 = vpack.c.b16 %v927, %v923
    %v1140 = vpack.c.b16 %v928, %v924
    %v1141 = vpack.c.b16 %v933, %v929
    %v1142 = vpack.c.b16 %v934, %v930
    %v1143 = vpack.c.b16 %v935, %v931
    %v1144 = vpack.c.b16 %v936, %v932
    %v1145 = vpack.c.b16 %v941, %v937
    %v1146 = vpack.c.b16 %v942, %v938
    %v1147 = vpack.c.b16 %v943, %v939
    %v1148 = vpack.c.b16 %v944, %v940
    %v1149 = vpack.c.b16 %v949, %v945
    %v1150 = vpack.c.b16 %v950, %v946
    %v1151 = vpack.c.b16 %v951, %v947
    %v1152 = vpack.c.b16 %v952, %v948
    %v1153 = vpack.c.b16 %v957, %v953
    %v1154 = vpack.c.b16 %v958, %v954
    %v1155 = vpack.c.b16 %v959, %v955
    %v1156 = vpack.c.b16 %v960, %v956
    %v1157 = vpack.c.b16 %v965, %v961
    %v1158 = vpack.c.b16 %v966, %v962
    %v1159 = vpack.c.b16 %v967, %v963
    %v1160 = vpack.c.b16 %v968, %v964
    %v1161 = vpack.c.b16 %v973, %v969
    %v1162 = vpack.c.b16 %v974, %v970
    %v1163 = vpack.c.b16 %v975, %v971
    %v1164 = vpack.c.b16 %v976, %v972
    %v1165 = vpack.c.b16 %v981, %v977
    %v1166 = vpack.c.b16 %v982, %v978
    %v1167 = vpack.c.b16 %v983, %v979
    %v1168 = vpack.c.b16 %v984, %v980
    %v1169 = vpack.c.b16 %v989, %v985
    %v1170 = vpack.c.b16 %v990, %v986
    %v1171 = vpack.c.b16 %v991, %v987
    %v1172 = vpack.c.b16 %v992, %v988
    %v1173 = vpack.c.b16 %v997, %v993
    %v1174 = vpack.c.b16 %v998, %v994
    %v1175 = vpack.c.b16 %v999, %v995
    %v1176 = vpack.c.b16 %v1000, %v996
    %v1177 = vpack.c.b16 %v1005, %v1001
    %v1178 = vpack.c.b16 %v1006, %v1002
    %v1179 = vpack.c.b16 %v1007, %v1003
    %v1180 = vpack.c.b16 %v1008, %v1004
    %v1181 = vpack.c.b16 %v1013, %v1009
    %v1182 = vpack.c.b16 %v1014, %v1010
    %v1183 = vpack.c.b16 %v1015, %v1011
    %v1184 = vpack.c.b16 %v1016, %v1012
    %v1185 = vpack.c.b16 %v1021, %v1017
    %v1186 = vpack.c.b16 %v1022, %v1018
    %v1187 = vpack.c.b16 %v1023, %v1019
    %v1188 = vpack.c.b16 %v1024, %v1020
    %v1189 = vpack.c.b16 %v1029, %v1025
    %v1190 = vpack.c.b16 %v1030, %v1026
    %v1191 = vpack.c.b16 %v1031, %v1027
    %v1192 = vpack.c.b16 %v1032, %v1028
    %v1193 = vpack.c.b16 %v1037, %v1033
    %v1194 = vpack.c.b16 %v1038, %v1034
    %v1195 = vpack.c.b16 %v1039, %v1035
    %v1196 = vpack.c.b16 %v1040, %v1036
    %v1197 = vpack.c.b16 %v1045, %v1041
    %v1198 = vpack.c.b16 %v1046, %v1042
    %v1199 = vpack.c.b16 %v1047, %v1043
    %v1200 = vpack.c.b16 %v1048, %v1044
    %v1201 = vpack.c.b16 %v1053, %v1049
    %v1202 = vpack.c.b16 %v1054, %v1050
    %v1203 = vpack.c.b16 %v1055, %v1051
    %v1204 = vpack.c.b16 %v1056, %v1052
    %v1205 = vpack.c.b16 %v1061, %v1057
    %v1206 = vpack.c.b16 %v1062, %v1058
    %v1207 = vpack.c.b16 %v1063, %v1059
    %v1208 = vpack.c.b16 %v1064, %v1060
    %v1209 = vpack.c.b16 %v1069, %v1065
    %v1210 = vpack.c.b16 %v1070, %v1066
    %v1211 = vpack.c.b16 %v1071, %v1067
    %v1212 = vpack.c.b16 %v1072, %v1068
    %v1213 = vpack.c.b16 %v1077, %v1073
    %v1214 = vpack.c.b16 %v1078, %v1074
    %v1215 = vpack.c.b16 %v1079, %v1075
    %v1216 = vpack.c.b16 %v1080, %v1076
    %v1217 = vpack.c.b16 %v1085, %v1081
    %v1218 = vpack.c.b16 %v1086, %v1082
    %v1219 = vpack.c.b16 %v1087, %v1083
    %v1220 = vpack.c.b16 %v1088, %v1084
    %v1221 = vpack.c.b16 %v1093, %v1089
    %v1222 = vpack.c.b16 %v1094, %v1090
    %v1223 = vpack.c.b16 %v1095, %v1091
    %v1224 = vpack.c.b16 %v1096, %v1092
    %1353 = vmatpush.bf16.msra.mxu0 %v1125
    %1354 = vmatpush.bf16.msra.mxu0 %v1121
    %1355 = vmatpush.bf16.msra.mxu0 %v1117
    %1356 = vmatpush.bf16.msra.mxu0 %v1113
    %1357 = vmatpush.bf16.msra.mxu0 %v1109
    %1358 = vmatpush.bf16.msra.mxu0 %v1105
    %1359 = vmatpush.bf16.msra.mxu0 %v1101
    %1360 = vmatpush.bf16.msra.mxu0 %v1097
    %1361 = vmatmul.bf16.gmra.mxu0 %v581
    %v1362 = vpop.f32.mrf.mxu0
    %v1363 = vadd.f32 0.0, %v1362
    %v1364 = vpop.f32.mrf.mxu0
    %1365 = vdwg.mxu0
    %1366 = vmatpush.bf16.msra.mxu0 %v1157
    %1367 = vmatpush.bf16.msra.mxu0 %v1153
    %1368 = vmatpush.bf16.msra.mxu0 %v1149
    %1369 = vmatpush.bf16.msra.mxu0 %v1145
    %1370 = vmatpush.bf16.msra.mxu0 %v1141
    %1371 = vmatpush.bf16.msra.mxu0 %v1137
    %1372 = vmatpush.bf16.msra.mxu0 %v1133
    %1373 = vmatpush.bf16.msra.mxu0 %v1129
    %1374 = vmatmul.bf16.gmra.mxu0 %v582
    %v1375 = vpop.f32.mrf.mxu0
    %v1376 = vadd.f32 %v1363, %v1375
    %v1377 = vpop.f32.mrf.mxu0
    %1378 = vdwg.mxu0
    %1379 = vmatpush.bf16.msra.mxu0 %v1189
    %1380 = vmatpush.bf16.msra.mxu0 %v1185
    %1381 = vmatpush.bf16.msra.mxu0 %v1181
    %1382 = vmatpush.bf16.msra.mxu0 %v1177
    %1383 = vmatpush.bf16.msra.mxu0 %v1173
    %1384 = vmatpush.bf16.msra.mxu0 %v1169
    %1385 = vmatpush.bf16.msra.mxu0 %v1165
    %1386 = vmatpush.bf16.msra.mxu0 %v1161
    %1387 = vmatmul.bf16.gmra.mxu0 %v583
    %v1388 = vpop.f32.mrf.mxu0
    %v1389 = vadd.f32 %v1376, %v1388
    %v1390 = vpop.f32.mrf.mxu0
    %1391 = vdwg.mxu0
    %1392 = vmatpush.bf16.msra.mxu0 %v1221
    %1393 = vmatpush.bf16.msra.mxu0 %v1217
    %1394 = vmatpush.bf16.msra.mxu0 %v1213
    %1395 = vmatpush.bf16.msra.mxu0 %v1209
    %1396 = vmatpush.bf16.msra.mxu0 %v1205
    %1397 = vmatpush.bf16.msra.mxu0 %v1201
    %1398 = vmatpush.bf16.msra.mxu0 %v1197
    %1399 = vmatpush.bf16.msra.mxu0 %v1193
    %1400 = vmatmul.bf16.gmra.mxu0 %v584
    %v1401 = vpop.f32.mrf.mxu0
    %v1402 = vadd.f32 %v1389, %v1401
    %v1403 = vpop.f32.mrf.mxu0
    %1404 = vdwg.mxu0
    %1405 = vmatpush.bf16.msra.mxu0 %v1126
    %1406 = vmatpush.bf16.msra.mxu0 %v1122
    %1407 = vmatpush.bf16.msra.mxu0 %v1118
    %1408 = vmatpush.bf16.msra.mxu0 %v1114
    %1409 = vmatpush.bf16.msra.mxu0 %v1110
    %1410 = vmatpush.bf16.msra.mxu0 %v1106
    %1411 = vmatpush.bf16.msra.mxu0 %v1102
    %1412 = vmatpush.bf16.msra.mxu0 %v1098
    %1413 = vmatmul.bf16.gmra.mxu0 %v581
    %v1414 = vpop.f32.mrf.mxu0
    %v1415 = vadd.f32 0.0, %v1414
    %v1416 = vpop.f32.mrf.mxu0
    %1417 = vdwg.mxu0
    %1418 = vmatpush.bf16.msra.mxu0 %v1158
    %1419 = vmatpush.bf16.msra.mxu0 %v1154
    %1420 = vmatpush.bf16.msra.mxu0 %v1150
    %1421 = vmatpush.bf16.msra.mxu0 %v1146
    %1422 = vmatpush.bf16.msra.mxu0 %v1142
    %1423 = vmatpush.bf16.msra.mxu0 %v1138
    %1424 = vmatpush.bf16.msra.mxu0 %v1134
    %1425 = vmatpush.bf16.msra.mxu0 %v1130
    %1426 = vmatmul.bf16.gmra.mxu0 %v582
    %v1427 = vpop.f32.mrf.mxu0
    %v1428 = vadd.f32 %v1415, %v1427
    %v1429 = vpop.f32.mrf.mxu0
    %1430 = vdwg.mxu0
    %1431 = vmatpush.bf16.msra.mxu0 %v1190
    %1432 = vmatpush.bf16.msra.mxu0 %v1186
    %1433 = vmatpush.bf16.msra.mxu0 %v1182
    %1434 = vmatpush.bf16.msra.mxu0 %v1178
    %1435 = vmatpush.bf16.msra.mxu0 %v1174
    %1436 = vmatpush.bf16.msra.mxu0 %v1170
    %1437 = vmatpush.bf16.msra.mxu0 %v1166
    %1438 = vmatpush.bf16.msra.mxu0 %v1162
    %1439 = vmatmul.bf16.gmra.mxu0 %v583
    %v1440 = vpop.f32.mrf.mxu0
    %v1441 = vadd.f32 %v1428, %v1440
    %v1442 = vpop.f32.mrf.mxu0
    %1443 = vdwg.mxu0
    %1444 = vmatpush.bf16.msra.mxu0 %v1222
    %1445 = vmatpush.bf16.msra.mxu0 %v1218
    %1446 = vmatpush.bf16.msra.mxu0 %v1214
    %1447 = vmatpush.bf16.msra.mxu0 %v1210
    %1448 = vmatpush.bf16.msra.mxu0 %v1206
    %1449 = vmatpush.bf16.msra.mxu0 %v1202
    %1450 = vmatpush.bf16.msra.mxu0 %v1198
    %1451 = vmatpush.bf16.msra.mxu0 %v1194
    %1452 = vmatmul.bf16.gmra.mxu0 %v584
    %v1453 = vpop.f32.mrf.mxu0
    %v1454 = vadd.f32 %v1441, %v1453
    %v1455 = vpop.f32.mrf.mxu0
    %1456 = vdwg.mxu0
    %1457 = vmatpush.bf16.msra.mxu0 %v1127
    %1458 = vmatpush.bf16.msra.mxu0 %v1123
    %1459 = vmatpush.bf16.msra.mxu0 %v1119
    %1460 = vmatpush.bf16.msra.mxu0 %v1115
    %1461 = vmatpush.bf16.msra.mxu0 %v1111
    %1462 = vmatpush.bf16.msra.mxu0 %v1107
    %1463 = vmatpush.bf16.msra.mxu0 %v1103
    %1464 = vmatpush.bf16.msra.mxu0 %v1099
    %1465 = vmatmul.bf16.gmra.mxu0 %v581
    %v1466 = vpop.f32.mrf.mxu0
    %v1467 = vadd.f32 0.0, %v1466
    %v1468 = vpop.f32.mrf.mxu0
    %1469 = vdwg.mxu0
    %1470 = vmatpush.bf16.msra.mxu0 %v1159
    %1471 = vmatpush.bf16.msra.mxu0 %v1155
    %1472 = vmatpush.bf16.msra.mxu0 %v1151
    %1473 = vmatpush.bf16.msra.mxu0 %v1147
    %1474 = vmatpush.bf16.msra.mxu0 %v1143
    %1475 = vmatpush.bf16.msra.mxu0 %v1139
    %1476 = vmatpush.bf16.msra.mxu0 %v1135
    %1477 = vmatpush.bf16.msra.mxu0 %v1131
    %1478 = vmatmul.bf16.gmra.mxu0 %v582
    %v1479 = vpop.f32.mrf.mxu0
    %v1480 = vadd.f32 %v1467, %v1479
    %v1481 = vpop.f32.mrf.mxu0
    %1482 = vdwg.mxu0
    %1483 = vmatpush.bf16.msra.mxu0 %v1191
    %1484 = vmatpush.bf16.msra.mxu0 %v1187
    %1485 = vmatpush.bf16.msra.mxu0 %v1183
    %1486 = vmatpush.bf16.msra.mxu0 %v1179
    %1487 = vmatpush.bf16.msra.mxu0 %v1175
    %1488 = vmatpush.bf16.msra.mxu0 %v1171
    %1489 = vmatpush.bf16.msra.mxu0 %v1167
    %1490 = vmatpush.bf16.msra.mxu0 %v1163
    %1491 = vmatmul.bf16.gmra.mxu0 %v583
    %v1492 = vpop.f32.mrf.mxu0
    %v1493 = vadd.f32 %v1480, %v1492
    %v1494 = vpop.f32.mrf.mxu0
    %1495 = vdwg.mxu0
    %1496 = vmatpush.bf16.msra.mxu0 %v1223
    %1497 = vmatpush.bf16.msra.mxu0 %v1219
    %1498 = vmatpush.bf16.msra.mxu0 %v1215
    %1499 = vmatpush.bf16.msra.mxu0 %v1211
    %1500 = vmatpush.bf16.msra.mxu0 %v1207
    %1501 = vmatpush.bf16.msra.mxu0 %v1203
    %1502 = vmatpush.bf16.msra.mxu0 %v1199
    %1503 = vmatpush.bf16.msra.mxu0 %v1195
    %1504 = vmatmul.bf16.gmra.mxu0 %v584
    %v1505 = vpop.f32.mrf.mxu0
    %v1506 = vadd.f32 %v1493, %v1505
    %v1507 = vpop.f32.mrf.mxu0
    %1508 = vdwg.mxu0
    %1509 = vmatpush.bf16.msra.mxu0 %v1128
    %1510 = vmatpush.bf16.msra.mxu0 %v1124
    %1511 = vmatpush.bf16.msra.mxu0 %v1120
    %1512 = vmatpush.bf16.msra.mxu0 %v1116
    %1513 = vmatpush.bf16.msra.mxu0 %v1112
    %1514 = vmatpush.bf16.msra.mxu0 %v1108
    %1515 = vmatpush.bf16.msra.mxu0 %v1104
    %1516 = vmatpush.bf16.msra.mxu0 %v1100
    %1517 = vmatmul.bf16.gmra.mxu0 %v581
    %v1518 = vpop.f32.mrf.mxu0
    %v1519 = vadd.f32 0.0, %v1518
    %v1520 = vpop.f32.mrf.mxu0
    %1521 = vdwg.mxu0
    %1522 = vmatpush.bf16.msra.mxu0 %v1160
    %1523 = vmatpush.bf16.msra.mxu0 %v1156
    %1524 = vmatpush.bf16.msra.mxu0 %v1152
    %1525 = vmatpush.bf16.msra.mxu0 %v1148
    %1526 = vmatpush.bf16.msra.mxu0 %v1144
    %1527 = vmatpush.bf16.msra.mxu0 %v1140
    %1528 = vmatpush.bf16.msra.mxu0 %v1136
    %1529 = vmatpush.bf16.msra.mxu0 %v1132
    %1530 = vmatmul.bf16.gmra.mxu0 %v582
    %v1531 = vpop.f32.mrf.mxu0
    %v1532 = vadd.f32 %v1519, %v1531
    %v1533 = vpop.f32.mrf.mxu0
    %1534 = vdwg.mxu0
    %1535 = vmatpush.bf16.msra.mxu0 %v1192
    %1536 = vmatpush.bf16.msra.mxu0 %v1188
    %1537 = vmatpush.bf16.msra.mxu0 %v1184
    %1538 = vmatpush.bf16.msra.mxu0 %v1180
    %1539 = vmatpush.bf16.msra.mxu0 %v1176
    %1540 = vmatpush.bf16.msra.mxu0 %v1172
    %1541 = vmatpush.bf16.msra.mxu0 %v1168
    %1542 = vmatpush.bf16.msra.mxu0 %v1164
    %1543 = vmatmul.bf16.gmra.mxu0 %v583
    %v1544 = vpop.f32.mrf.mxu0
    %v1545 = vadd.f32 %v1532, %v1544
    %v1546 = vpop.f32.mrf.mxu0
    %1547 = vdwg.mxu0
    %1548 = vmatpush.bf16.msra.mxu0 %v1224
    %1549 = vmatpush.bf16.msra.mxu0 %v1220
    %1550 = vmatpush.bf16.msra.mxu0 %v1216
    %1551 = vmatpush.bf16.msra.mxu0 %v1212
    %1552 = vmatpush.bf16.msra.mxu0 %v1208
    %1553 = vmatpush.bf16.msra.mxu0 %v1204
    %1554 = vmatpush.bf16.msra.mxu0 %v1200
    %1555 = vmatpush.bf16.msra.mxu0 %v1196
    %1556 = vmatmul.bf16.gmra.mxu0 %v584
    %v1557 = vpop.f32.mrf.mxu0
    %v1558 = vadd.f32 %v1545, %v1557
    %v1559 = vpop.f32.mrf.mxu0
    %1560 = vdwg.mxu0
    %v1561 = vrot.slane %v1402, 4
    %v1562 = vadd.f32 %v1402, %v1561
    %v1563 = vrot.slane %v1562, 2
    %v1564 = vadd.f32 %v1562, %v1563
    %v1565 = vrot.slane %v1564, 1
    %v1566 = vadd.f32 %v1564, %v1565
    %v1567 = vrot.slane %v1454, 4
    %v1568 = vadd.f32 %v1454, %v1567
    %v1569 = vrot.slane %v1568, 2
    %v1570 = vadd.f32 %v1568, %v1569
    %v1571 = vrot.slane %v1570, 1
    %v1572 = vadd.f32 %v1570, %v1571
    %v1573 = vrot.slane %v1506, 4
    %v1574 = vadd.f32 %v1506, %v1573
    %v1575 = vrot.slane %v1574, 2
    %v1576 = vadd.f32 %v1574, %v1575
    %v1577 = vrot.slane %v1576, 1
    %v1578 = vadd.f32 %v1576, %v1577
    %v1579 = vrot.slane %v1558, 4
    %v1580 = vadd.f32 %v1558, %v1579
    %v1581 = vrot.slane %v1580, 2
    %v1582 = vadd.f32 %v1580, %v1581
    %v1583 = vrot.slane %v1582, 1
    %v1584 = vadd.f32 %v1582, %v1583
    %v1585 = vmul.f32 %v1402, %v1402
    %v1586 = vmul.f32 %v1454, %v1454
    %v1587 = vmul.f32 %v1506, %v1506
    %v1588 = vmul.f32 %v1558, %v1558
    %v1589 = vrot.slane %v1585, 4
    %v1590 = vadd.f32 %v1585, %v1589
    %v1591 = vrot.slane %v1590, 2
    %v1592 = vadd.f32 %v1590, %v1591
    %v1593 = vrot.slane %v1592, 1
    %v1594 = vadd.f32 %v1592, %v1593
    %v1595 = vrot.slane %v1586, 4
    %v1596 = vadd.f32 %v1586, %v1595
    %v1597 = vrot.slane %v1596, 2
    %v1598 = vadd.f32 %v1596, %v1597
    %v1599 = vrot.slane %v1598, 1
    %v1600 = vadd.f32 %v1598, %v1599
    %v1601 = vrot.slane %v1587, 4
    %v1602 = vadd.f32 %v1587, %v1601
    %v1603 = vrot.slane %v1602, 2
    %v1604 = vadd.f32 %v1602, %v1603
    %v1605 = vrot.slane %v1604, 1
    %v1606 = vadd.f32 %v1604, %v1605
    %v1607 = vrot.slane %v1588, 4
    %v1608 = vadd.f32 %v1588, %v1607
    %v1609 = vrot.slane %v1608, 2
    %v1610 = vadd.f32 %v1608, %v1609
    %v1611 = vrot.slane %v1610, 1
    %v1612 = vadd.f32 %v1610, %v1611
    %v1613 = vmul.f32 %v1566, 0.125
    %v1614 = vmul.f32 %v1572, 0.125
    %v1615 = vmul.f32 %v1578, 0.125
    %v1616 = vmul.f32 %v1584, 0.125
    %v1617 = vmul.f32 %v1594, 0.125
    %v1618 = vmul.f32 %v1600, 0.125
    %v1619 = vmul.f32 %v1606, 0.125
    %v1620 = vmul.f32 %v1612, 0.125
    %v1621 = vmul.f32 %v1613, %v1613
    %v1622 = vmul.f32 %v1614, %v1614
    %v1623 = vmul.f32 %v1615, %v1615
    %v1624 = vmul.f32 %v1616, %v1616
    %v1625 = vsub.f32 %v1617, %v1621
    %v1626 = vsub.f32 %v1618, %v1622
    %v1627 = vsub.f32 %v1619, %v1623
    %v1628 = vsub.f32 %v1620, %v1624
    %v1629 = vadd.f32 %v1625, 1e-05
    %v1630 = vadd.f32 %v1626, 1e-05
    %v1631 = vadd.f32 %v1627, 1e-05
    %v1632 = vadd.f32 %v1628, 1e-05
    %v1633 = vrsqrt.pop %v1629
    %v1634 = vmul.f32 %v1633, %v1629
    %v1635 = vmul.f32 %v1634, %v1633
    %v1636 = vmul.f32 0.5, %v1635
    %v1637 = vsub.f32 1.5, %v1636
    %v1638 = vmul.f32 %v1633, %v1637
    %vm1639 = vweird.f32 %v1629
    %vm1640 = vweird.f32 %v1633
    %vm1641 = vmor %vm1639, %vm1640
    %v1642 = vsel %vm1641, %v1633, %v1638
    %v1643 = vrsqrt.pop %v1630
    %v1644 = vmul.f32 %v1643, %v1630
    %v1645 = vmul.f32 %v1644, %v1643
    %v1646 = vmul.f32 0.5, %v1645
    %v1647 = vsub.f32 1.5, %v1646
    %v1648 = vmul.f32 %v1643, %v1647
    %vm1649 = vweird.f32 %v1630
    %vm1650 = vweird.f32 %v1643
    %vm1651 = vmor %vm1649, %vm1650
    %v1652 = vsel %vm1651, %v1643, %v1648
    %v1653 = vrsqrt.pop %v1631
    %v1654 = vmul.f32 %v1653, %v1631
    %v1655 = vmul.f32 %v1654, %v1653
    %v1656 = vmul.f32 0.5, %v1655
    %v1657 = vsub.f32 1.5, %v1656
    %v1658 = vmul.f32 %v1653, %v1657
    %vm1659 = vweird.f32 %v1631
    %vm1660 = vweird.f32 %v1653
    %vm1661 = vmor %vm1659, %vm1660
    %v1662 = vsel %vm1661, %v1653, %v1658
    %v1663 = vrsqrt.pop %v1632
    %v1664 = vmul.f32 %v1663, %v1632
    %v1665 = vmul.f32 %v1664, %v1663
    %v1666 = vmul.f32 0.5, %v1665
    %v1667 = vsub.f32 1.5, %v1666
    %v1668 = vmul.f32 %v1663, %v1667
    %vm1669 = vweird.f32 %v1632
    %vm1670 = vweird.f32 %v1663
    %vm1671 = vmor %vm1669, %vm1670
    %v1672 = vsel %vm1671, %v1663, %v1668
    %v1677 = vrot.slane %v1652, 7
    %v1678 = vrot.slane %v1662, 6
    %v1679 = vrot.slane %v1672, 5
    %vm1680 = vcmask 1040384
    %v1681 = vsel %vm1680, %v1642, %v1677
    %vm1682 = vcmask 1042434
    %v1683 = vsel %vm1682, %v1678, %v1679
    %vm1684 = vcmask 1041408
    %v1685 = vsel %vm1684, %v1681, %v1683
    %v1687 = vmul.f32 %v67, %v1685
    %v1689 = vperm.slane %v1687, 0
    %v1690 = vperm.slane %v1687, 1
    %v1691 = vperm.slane %v1687, 2
    %v1692 = vperm.slane %v1687, 3
    %v1697 = vmul.f32 %v1613, %v1689
    %v1698 = vmul.f32 %v1614, %v1690
    %v1699 = vmul.f32 %v1615, %v1691
    %v1700 = vmul.f32 %v1616, %v1692
    %v1705 = vrot.slane %v1698, 7
    %v1706 = vrot.slane %v1699, 6
    %v1707 = vrot.slane %v1700, 5
    %v1708 = vsel %vm1680, %v1697, %v1705
    %v1709 = vsel %vm1682, %v1706, %v1707
    %v1710 = vsel %vm1684, %v1708, %v1709
    %v1712 = vsub.f32 %v69, %v1710
    %v1713 = vmul.f32 %v1402, %v1689
    %v1714 = vmul.f32 %v1454, %v1690
    %v1715 = vmul.f32 %v1506, %v1691
    %v1716 = vmul.f32 %v1558, %v1692
    %v1718 = vperm.slane %v1712, 0
    %v1719 = vperm.slane %v1712, 1
    %v1720 = vperm.slane %v1712, 2
    %v1721 = vperm.slane %v1712, 3
    %v1726 = vadd.f32 %v1713, %v1718
    %v1727 = vadd.f32 %v1714, %v1719
    %v1728 = vadd.f32 %v1715, %v1720
    %v1729 = vadd.f32 %v1716, %v1721
    %vm1730 = vcmp.gt.f32.partialorder %v1726, 0.0
    %vm1731 = vcmp.gt.f32.partialorder %v1727, 0.0
    %vm1732 = vcmp.gt.f32.partialorder %v1728, 0.0
    %vm1733 = vcmp.gt.f32.partialorder %v1729, 0.0
    %v1734 = vmul.f32 %v1726, 0.2
    %v1735 = vmul.f32 %v1727, 0.2
    %v1736 = vmul.f32 %v1728, 0.2
    %v1737 = vmul.f32 %v1729, 0.2
    %v1738 = vsel %vm1730, %v1726, %v1734
    %v1739 = vsel %vm1731, %v1727, %v1735
    %v1740 = vsel %vm1732, %v1728, %v1736
    %v1741 = vsel %vm1733, %v1729, %v1737
    %v1742 = vpack.c.bf16 %v1738, %v1738
    %v1743 = vpack.c.bf16 %v1739, %v1739
    %v1744 = vpack.c.bf16 %v1740, %v1740
    %v1745 = vpack.c.bf16 %v1741, %v1741
    %v1746 = vld [vmem:[%s4] sm:$0xf]
    %v1747 = vld [vmem:[%s4 + $0x4] sm:$0xf]
    %v1748 = vld [vmem:[%s4 + $0x8] sm:$0xf]
    %v1749 = vld [vmem:[%s4 + $0xc] sm:$0xf]
    %v1750 = vld [vmem:[%s4 + $0x10] sm:$0xf]
    %v1751 = vld [vmem:[%s4 + $0x14] sm:$0xf]
    %v1752 = vld [vmem:[%s4 + $0x18] sm:$0xf]
    %v1753 = vld [vmem:[%s4 + $0x1c] sm:$0xf]
    %v1754 = vld [vmem:[%s4 + $0x20] sm:$0xf]
    %v1755 = vld [vmem:[%s4 + $0x24] sm:$0xf]
    %v1756 = vld [vmem:[%s4 + $0x28] sm:$0xf]
    %v1757 = vld [vmem:[%s4 + $0x2c] sm:$0xf]
    %v1758 = vld [vmem:[%s4 + $0x30] sm:$0xf]
    %v1759 = vld [vmem:[%s4 + $0x34] sm:$0xf]
    %v1760 = vld [vmem:[%s4 + $0x38] sm:$0xf]
    %v1761 = vld [vmem:[%s4 + $0x3c] sm:$0xf]
    %v1762 = vld [vmem:[%s4 + $0x40] sm:$0xf]
    %v1763 = vld [vmem:[%s4 + $0x44] sm:$0xf]
    %v1764 = vld [vmem:[%s4 + $0x48] sm:$0xf]
    %v1765 = vld [vmem:[%s4 + $0x4c] sm:$0xf]
    %v1766 = vld [vmem:[%s4 + $0x50] sm:$0xf]
    %v1767 = vld [vmem:[%s4 + $0x54] sm:$0xf]
    %v1768 = vld [vmem:[%s4 + $0x58] sm:$0xf]
    %v1769 = vld [vmem:[%s4 + $0x5c] sm:$0xf]
    %v1770 = vld [vmem:[%s4 + $0x60] sm:$0xf]
    %v1771 = vld [vmem:[%s4 + $0x64] sm:$0xf]
    %v1772 = vld [vmem:[%s4 + $0x68] sm:$0xf]
    %v1773 = vld [vmem:[%s4 + $0x6c] sm:$0xf]
    %v1774 = vld [vmem:[%s4 + $0x70] sm:$0xf]
    %v1775 = vld [vmem:[%s4 + $0x74] sm:$0xf]
    %v1776 = vld [vmem:[%s4 + $0x78] sm:$0xf]
    %v1777 = vld [vmem:[%s4 + $0x7c] sm:$0xf]
    %v1778 = vld [vmem:[%s4 + $0x80] sm:$0xf]
    %v1779 = vld [vmem:[%s4 + $0x84] sm:$0xf]
    %v1780 = vld [vmem:[%s4 + $0x88] sm:$0xf]
    %v1781 = vld [vmem:[%s4 + $0x8c] sm:$0xf]
    %v1782 = vld [vmem:[%s4 + $0x90] sm:$0xf]
    %v1783 = vld [vmem:[%s4 + $0x94] sm:$0xf]
    %v1784 = vld [vmem:[%s4 + $0x98] sm:$0xf]
    %v1785 = vld [vmem:[%s4 + $0x9c] sm:$0xf]
    %v1786 = vld [vmem:[%s4 + $0xa0] sm:$0xf]
    %v1787 = vld [vmem:[%s4 + $0xa4] sm:$0xf]
    %v1788 = vld [vmem:[%s4 + $0xa8] sm:$0xf]
    %v1789 = vld [vmem:[%s4 + $0xac] sm:$0xf]
    %v1790 = vld [vmem:[%s4 + $0xb0] sm:$0xf]
    %v1791 = vld [vmem:[%s4 + $0xb4] sm:$0xf]
    %v1792 = vld [vmem:[%s4 + $0xb8] sm:$0xf]
    %v1793 = vld [vmem:[%s4 + $0xbc] sm:$0xf]
    %v1794 = vld [vmem:[%s4 + $0xc0] sm:$0xf]
    %v1795 = vld [vmem:[%s4 + $0xc4] sm:$0xf]
    %v1796 = vld [vmem:[%s4 + $0xc8] sm:$0xf]
    %v1797 = vld [vmem:[%s4 + $0xcc] sm:$0xf]
    %v1798 = vld [vmem:[%s4 + $0xd0] sm:$0xf]
    %v1799 = vld [vmem:[%s4 + $0xd4] sm:$0xf]
    %v1800 = vld [vmem:[%s4 + $0xd8] sm:$0xf]
    %v1801 = vld [vmem:[%s4 + $0xdc] sm:$0xf]
    %v1802 = vld [vmem:[%s4 + $0xe0] sm:$0xf]
    %v1803 = vld [vmem:[%s4 + $0xe4] sm:$0xf]
    %v1804 = vld [vmem:[%s4 + $0xe8] sm:$0xf]
    %v1805 = vld [vmem:[%s4 + $0xec] sm:$0xf]
    %v1806 = vld [vmem:[%s4 + $0xf0] sm:$0xf]
    %v1807 = vld [vmem:[%s4 + $0xf4] sm:$0xf]
    %v1808 = vld [vmem:[%s4 + $0xf8] sm:$0xf]
    %v1809 = vld [vmem:[%s4 + $0xfc] sm:$0xf]
    %v1810 = vld [vmem:[%s6] sm:$0x1]
    %v1812 = vperm.slane %v1810, 0
    %v1878 = vunpack.c.l.b16 %v1746
    %v1879 = vunpack.c.l.b16 %v1747
    %v1880 = vunpack.c.l.b16 %v1748
    %v1881 = vunpack.c.l.b16 %v1749
    %v1882 = vunpack.c.l.b16 %v1750
    %v1883 = vunpack.c.l.b16 %v1751
    %v1884 = vunpack.c.l.b16 %v1752
    %v1885 = vunpack.c.l.b16 %v1753
    %v1886 = vunpack.c.l.b16 %v1754
    %v1887 = vunpack.c.l.b16 %v1755
    %v1888 = vunpack.c.l.b16 %v1756
    %v1889 = vunpack.c.l.b16 %v1757
    %v1890 = vunpack.c.l.b16 %v1758
    %v1891 = vunpack.c.l.b16 %v1759
    %v1892 = vunpack.c.l.b16 %v1760
    %v1893 = vunpack.c.l.b16 %v1761
    %v1894 = vunpack.c.l.b16 %v1762
    %v1895 = vunpack.c.l.b16 %v1763
    %v1896 = vunpack.c.l.b16 %v1764
    %v1897 = vunpack.c.l.b16 %v1765
    %v1898 = vunpack.c.l.b16 %v1766
    %v1899 = vunpack.c.l.b16 %v1767
    %v1900 = vunpack.c.l.b16 %v1768
    %v1901 = vunpack.c.l.b16 %v1769
    %v1902 = vunpack.c.l.b16 %v1770
    %v1903 = vunpack.c.l.b16 %v1771
    %v1904 = vunpack.c.l.b16 %v1772
    %v1905 = vunpack.c.l.b16 %v1773
    %v1906 = vunpack.c.l.b16 %v1774
    %v1907 = vunpack.c.l.b16 %v1775
    %v1908 = vunpack.c.l.b16 %v1776
    %v1909 = vunpack.c.l.b16 %v1777
    %v1910 = vunpack.c.l.b16 %v1778
    %v1911 = vunpack.c.l.b16 %v1779
    %v1912 = vunpack.c.l.b16 %v1780
    %v1913 = vunpack.c.l.b16 %v1781
    %v1914 = vunpack.c.l.b16 %v1782
    %v1915 = vunpack.c.l.b16 %v1783
    %v1916 = vunpack.c.l.b16 %v1784
    %v1917 = vunpack.c.l.b16 %v1785
    %v1918 = vunpack.c.l.b16 %v1786
    %v1919 = vunpack.c.l.b16 %v1787
    %v1920 = vunpack.c.l.b16 %v1788
    %v1921 = vunpack.c.l.b16 %v1789
    %v1922 = vunpack.c.l.b16 %v1790
    %v1923 = vunpack.c.l.b16 %v1791
    %v1924 = vunpack.c.l.b16 %v1792
    %v1925 = vunpack.c.l.b16 %v1793
    %v1926 = vunpack.c.l.b16 %v1794
    %v1927 = vunpack.c.l.b16 %v1795
    %v1928 = vunpack.c.l.b16 %v1796
    %v1929 = vunpack.c.l.b16 %v1797
    %v1930 = vunpack.c.l.b16 %v1798
    %v1931 = vunpack.c.l.b16 %v1799
    %v1932 = vunpack.c.l.b16 %v1800
    %v1933 = vunpack.c.l.b16 %v1801
    %v1934 = vunpack.c.l.b16 %v1802
    %v1935 = vunpack.c.l.b16 %v1803
    %v1936 = vunpack.c.l.b16 %v1804
    %v1937 = vunpack.c.l.b16 %v1805
    %v1938 = vunpack.c.l.b16 %v1806
    %v1939 = vunpack.c.l.b16 %v1807
    %v1940 = vunpack.c.l.b16 %v1808
    %v1941 = vunpack.c.l.b16 %v1809
    %v1942 = vpack.c.b16 %v1879, %v1878
    %v1943 = vpack.c.b16 %v1881, %v1880
    %v1944 = vpack.c.b16 %v1883, %v1882
    %v1945 = vpack.c.b16 %v1885, %v1884
    %v1946 = vpack.c.b16 %v1887, %v1886
    %v1947 = vpack.c.b16 %v1889, %v1888
    %v1948 = vpack.c.b16 %v1891, %v1890
    %v1949 = vpack.c.b16 %v1893, %v1892
    %v1950 = vpack.c.b16 %v1895, %v1894
    %v1951 = vpack.c.b16 %v1897, %v1896
    %v1952 = vpack.c.b16 %v1899, %v1898
    %v1953 = vpack.c.b16 %v1901, %v1900
    %v1954 = vpack.c.b16 %v1903, %v1902
    %v1955 = vpack.c.b16 %v1905, %v1904
    %v1956 = vpack.c.b16 %v1907, %v1906
    %v1957 = vpack.c.b16 %v1909, %v1908
    %v1958 = vpack.c.b16 %v1911, %v1910
    %v1959 = vpack.c.b16 %v1913, %v1912
    %v1960 = vpack.c.b16 %v1915, %v1914
    %v1961 = vpack.c.b16 %v1917, %v1916
    %v1962 = vpack.c.b16 %v1919, %v1918
    %v1963 = vpack.c.b16 %v1921, %v1920
    %v1964 = vpack.c.b16 %v1923, %v1922
    %v1965 = vpack.c.b16 %v1925, %v1924
    %v1966 = vpack.c.b16 %v1927, %v1926
    %v1967 = vpack.c.b16 %v1929, %v1928
    %v1968 = vpack.c.b16 %v1931, %v1930
    %v1969 = vpack.c.b16 %v1933, %v1932
    %v1970 = vpack.c.b16 %v1935, %v1934
    %v1971 = vpack.c.b16 %v1937, %v1936
    %v1972 = vpack.c.b16 %v1939, %v1938
    %v1973 = vpack.c.b16 %v1941, %v1940
    %2006 = vmatpush.bf16.msra.mxu0 %v1949
    %2007 = vmatpush.bf16.msra.mxu0 %v1948
    %2008 = vmatpush.bf16.msra.mxu0 %v1947
    %2009 = vmatpush.bf16.msra.mxu0 %v1946
    %2010 = vmatpush.bf16.msra.mxu0 %v1945
    %2011 = vmatpush.bf16.msra.mxu0 %v1944
    %2012 = vmatpush.bf16.msra.mxu0 %v1943
    %2013 = vmatpush.bf16.msra.mxu0 %v1942
    %2014 = vmatmul.bf16.gmra.mxu0 %v1742
    %v2015 = vpop.f32.mrf.mxu0
    %v2016 = vadd.f32 %v1812, %v2015
    %v2017 = vpop.f32.mrf.mxu0
    %2018 = vdwg.mxu0
    %2019 = vmatpush.bf16.msra.mxu0 %v1957
    %2020 = vmatpush.bf16.msra.mxu0 %v1956
    %2021 = vmatpush.bf16.msra.mxu0 %v1955
    %2022 = vmatpush.bf16.msra.mxu0 %v1954
    %2023 = vmatpush.bf16.msra.mxu0 %v1953
    %2024 = vmatpush.bf16.msra.mxu0 %v1952
    %2025 = vmatpush.bf16.msra.mxu0 %v1951
    %2026 = vmatpush.bf16.msra.mxu0 %v1950
    %2027 = vmatmul.bf16.gmra.mxu0 %v1743
    %v2028 = vpop.f32.mrf.mxu0
    %v2029 = vadd.f32 %v2016, %v2028
    %v2030 = vpop.f32.mrf.mxu0
    %2031 = vdwg.mxu0
    %2032 = vmatpush.bf16.msra.mxu0 %v1965
    %2033 = vmatpush.bf16.msra.mxu0 %v1964
    %2034 = vmatpush.bf16.msra.mxu0 %v1963
    %2035 = vmatpush.bf16.msra.mxu0 %v1962
    %2036 = vmatpush.bf16.msra.mxu0 %v1961
    %2037 = vmatpush.bf16.msra.mxu0 %v1960
    %2038 = vmatpush.bf16.msra.mxu0 %v1959
    %2039 = vmatpush.bf16.msra.mxu0 %v1958
    %2040 = vmatmul.bf16.gmra.mxu0 %v1744
    %v2041 = vpop.f32.mrf.mxu0
    %v2042 = vadd.f32 %v2029, %v2041
    %v2043 = vpop.f32.mrf.mxu0
    %2044 = vdwg.mxu0
    %2045 = vmatpush.bf16.msra.mxu0 %v1973
    %2046 = vmatpush.bf16.msra.mxu0 %v1972
    %2047 = vmatpush.bf16.msra.mxu0 %v1971
    %2048 = vmatpush.bf16.msra.mxu0 %v1970
    %2049 = vmatpush.bf16.msra.mxu0 %v1969
    %2050 = vmatpush.bf16.msra.mxu0 %v1968
    %2051 = vmatpush.bf16.msra.mxu0 %v1967
    %2052 = vmatpush.bf16.msra.mxu0 %v1966
    %2053 = vmatmul.bf16.gmra.mxu0 %v1745
    %v2054 = vpop.f32.mrf.mxu0
    %v2055 = vadd.f32 %v2042, %v2054
    %v2056 = vpop.f32.mrf.mxu0
    %2057 = vdwg.mxu0
    %v2058 = vld [vmem:[%s1] sm:$0xff]
    %v2059 = vmul.f32 %v2055, 0.5
    %v2060 = vmul.f32 %v2059, 1.442695
    %v2061 = vpow.pop %v2060
    %2063 = vrot.lane.b32.xlu0 %v2061, 96
    %v2064 = vpop.permute.xlu0 %2063
    %v2066 = vmul.f32 %v2058, %v2064
    %v2067 = vadd.f32 %v2055, %v2066
    %vm2068 = vcmask 261120
    %2069 = vst.msk [vmem:[#allocation7] sm:$0xff] %vm2068, %v2067
    %2070 = vst.msk [vmem:[#allocation8] sm:$0xff] %vm2068, %v2055
    %2072 = vrot.lane.b32.xlu0 %v2055, 96
    %v2073 = vpop.permute.xlu0 %2072
    %2075 = vst.msk [vmem:[#allocation10] sm:$0xff] %vm2068, %v2073
    // Predicated region
    $region38: #{tpu_custom_call.1} parent=1 // pred_check
      _
    $region39: #{tpu_custom_call.1} parent=1 // pred_check_branch
      %2077 = sbr.rel (0) target = $region41
    $region40: #{tpu_custom_call.1} parent=1 // pred_region
      %2079 = vsyncadd [#allocation4], 0
      %s2081 = sshll.u32 [#allocation7], 4
      %s2082 = int_to_ptr.vmem [resolvable:$true] %s2081
      %s2083 = sshll.u32 %s7, 4
      %s2084 = int_to_ptr.hbm [resolvable:$true] %s2083
      %2086 = dma.vmem_to_hbm [thread:$0]  %s2082, 128, %s2084, [#allocation4]
    $region41: #{tpu_custom_call.1} parent=1 // pred_fallthru
      _
    // Predicated region
    $region42: #{tpu_custom_call.1} parent=1 // pred_check
      _
    $region43: #{tpu_custom_call.1} parent=1 // pred_check_branch
      %2088 = sbr.rel (0) target = $region45
    $region44: #{tpu_custom_call.1} parent=1 // pred_region
      %2090 = vsyncadd [#allocation9], 0
      %s2092 = sshll.u32 [#allocation8], 4
      %s2093 = int_to_ptr.vmem [resolvable:$true] %s2092
      %s2094 = sshll.u32 %s8, 4
      %s2095 = int_to_ptr.hbm [resolvable:$true] %s2094
      %2097 = dma.vmem_to_hbm [thread:$0]  %s2093, 128, %s2095, [#allocation9]
    $region45: #{tpu_custom_call.1} parent=1 // pred_fallthru
      _
    // Predicated region
    $region46: #{tpu_custom_call.1} parent=1 // pred_check
      _
    $region47: #{tpu_custom_call.1} parent=1 // pred_check_branch
      %2099 = sbr.rel (0) target = $region49
    $region48: #{tpu_custom_call.1} parent=1 // pred_region
      %2101 = vsyncadd [#allocation9], 0
      %s2103 = sshll.u32 [#allocation10], 4
      %s2104 = int_to_ptr.vmem [resolvable:$true] %s2103
      %s2105 = sshll.u32 %s9, 4
      %s2106 = int_to_ptr.hbm [resolvable:$true] %s2105
      %2108 = dma.vmem_to_hbm [thread:$0]  %s2104, 128, %s2106, [#allocation9]
    $region49: #{tpu_custom_call.1} parent=1 // pred_fallthru
      _
    // Predicated region
    $region50: #{tpu_custom_call.1} parent=1 // pred_check
      _
    $region51: #{tpu_custom_call.1} parent=1 // pred_check_branch
      %2110 = sbr.rel (0) target = $region53
    $region52: #{tpu_custom_call.1} parent=1 // pred_region
      %2112 = dma.done [#allocation4], 128
    $region53: #{tpu_custom_call.1} parent=1 // pred_fallthru
      _
    // Predicated region
    $region54: #{tpu_custom_call.1} parent=1 // pred_check
      _
    $region55: #{tpu_custom_call.1} parent=1 // pred_check_branch
      %2114 = sbr.rel (0) target = $region57
    $region56: #{tpu_custom_call.1} parent=1 // pred_region
      %2116 = dma.done [#allocation9], 128
    $region57: #{tpu_custom_call.1} parent=1 // pred_fallthru
      _
    // Predicated region
    $region58: #{tpu_custom_call.1} parent=1 // pred_check
      _
    $region59: #{tpu_custom_call.1} parent=1 // pred_check_branch
      %2118 = sbr.rel (0) target = $region61
    $region60: #{tpu_custom_call.1} parent=1 // pred_region
      %2120 = dma.done [#allocation9], 128
    $region61: #{tpu_custom_call.1} parent=1 // pred_fallthru
      _
    %2121 = vsyncpa [#allocation3], 1
    %2122 = vsyncpa [#allocation6], 1
    %2123 = vsyncpa [#allocation4], 1
    %2124 = vsyncpa [#allocation9], 1

</llo_original>
